<compile_context>
chip_gen: v5e
topology: v5e:2x2
jax: 0.10.0
libtpu: 0.0.40
codegen_flags: <defaults>
</compile_context>

<pallas_src>
import functools

import jax
import jax.numpy as jnp
import numpy as np
from jax import lax
from jax.experimental import pallas as pl
from jax.experimental.pallas import tpu as pltpu


def _round_up(v, m):
    return (v + m - 1) // m * m


# ---------------------------------------------------------------------------
# Kernel A: shift-and-matmul convolution + per-channel sum / sum-of-squares.
#
#   x0_ref, x1_ref : (Cin_p, tm) bf16   -- lane tiles i and i+1 of the flattened
#                                          padded input (overlapping window)
#   w_ref          : (kh*kw, Cout_p, Cin_p) f32 (resident; cast to bf16 in-kernel)
#   mask_ref       : (1, tm) f32        -- 1.0 at positions that are real conv
#                                          outputs (for the BN statistics)
#   y_ref          : (Cout_p, tm) f32   -- conv output tile (lane-dense)
#   sum_ref/sumsq_ref : (Cout_p, 1) f32 -- resident accumulators across the grid
# ---------------------------------------------------------------------------
def _conv_stats_kernel(x0_ref, x1_ref, w_ref, mask_ref, y_ref, sum_ref, sumsq_ref,
                       *, kh, kw, wp, tm):
    i = pl.program_id(0)

    # Overlapping window of the flattened padded input: columns [i*tm, i*tm + 2*tm).
    xcat = jnp.concatenate([x0_ref[...], x1_ref[...]], axis=1)  # (Cin_p, 2*tm) bf16

    acc = jnp.zeros(y_ref.shape, jnp.float32)                   # (Cout_p, tm)
    for kidx in range(kh * kw):
        di, dj = kidx // kw, kidx % kw
        off = di * wp + dj                                       # static lane shift
        xs = xcat[:, off:off + tm]                               # (Cin_p, tm) bf16
        wk = w_ref[kidx].astype(jnp.bfloat16)                    # (Cout_p, Cin_p)
        acc = acc + jnp.dot(wk, xs, preferred_element_type=jnp.float32)

    y_ref[...] = acc

    @pl.when(i == 0)
    def _():
        sum_ref[...] = jnp.zeros_like(sum_ref)
        sumsq_ref[...] = jnp.zeros_like(sumsq_ref)

    ym = acc * mask_ref[...]                                     # zero invalid positions
    sum_ref[...] += jnp.sum(ym, axis=1, keepdims=True)
    sumsq_ref[...] += jnp.sum(ym * acc, axis=1, keepdims=True)


# ---------------------------------------------------------------------------
# Kernel B: fused BatchNorm affine + LeakyReLU(0.2), in place over y.
# ---------------------------------------------------------------------------
def _bn_act_kernel(y_ref, scale_ref, shift_ref, o_ref):
    t = y_ref[...] * scale_ref[...] + shift_ref[...]             # (Cout_p, tm)
    o_ref[...] = jnp.where(t >= 0, t, jnp.float32(0.2) * t)


@functools.partial(jax.jit, static_argnames=("stride", "padding"))
def convolution_forward(x, weight, gamma, beta, *, stride, padding):
    """Conv2d(bias=False) -> BatchNorm2d(train, eps=1e-5) -> LeakyReLU(0.2).

    x: (N, Cin, H, W) float32 (NCHW), weight: (Cout, Cin, kh, kw) float32,
    gamma/beta: (Cout,) float32.  Returns (N, Cout, OH, OW) float32.
    """
    n, cin, h, w = x.shape
    cout, _, kh, kw = weight.shape
    eps = jnp.float32(1e-5)

    hp, wp = h + 2 * padding, w + 2 * padding
    oh1, ow1 = hp - kh + 1, wp - kw + 1          # stride-1 output extents
    oh = (oh1 - 1) // stride + 1                 # strided output extents
    ow = (ow1 - 1) // stride + 1

    cin_p = _round_up(cin, 8)
    cout_p = _round_up(cout, 8)

    tm = 512                                     # lane tile (raise for bigger problems)
    max_off = (kh - 1) * wp + (kw - 1)
    if max_off > tm:
        raise ValueError("kernel/image too large for the overlapping-window tile")

    m_out = n * hp * wp                          # padded-grid positions per batch
    grid_m = -(-m_out // tm)
    m_pad = grid_m * tm
    r_cols = (grid_m + 1) * tm                   # +1 block so the i+1 window exists

    # ---- input-sized glue: NCHW -> (Cin_p, N*Hp*Wp) bf16, zero padded ----------
    xb = x.astype(jnp.bfloat16)
    xt = jnp.transpose(xb, (0, 2, 3, 1))                                   # NHWC
    xpd = jnp.pad(xt, ((0, 0), (padding, padding), (padding, padding),
                       (0, cin_p - cin)))                                  # (N,Hp,Wp,Cin_p)
    xfT = jnp.transpose(xpd, (3, 0, 1, 2)).reshape(cin_p, m_out)
    xfT = jnp.pad(xfT, ((0, 0), (0, r_cols - m_out)))                      # (Cin_p, R)

    # weight -> (kh*kw, Cout_p, Cin_p), offset-major
    wstack = jnp.transpose(weight.astype(jnp.float32), (2, 3, 0, 1)).reshape(kh * kw, cout, cin)
    wstack = jnp.pad(wstack, ((0, 0), (0, cout_p - cout), (0, cin_p - cin)))

    # validity mask over padded-grid positions (selects the strided conv outputs)
    pos = jnp.arange(m_pad, dtype=jnp.int32)
    rr = pos % (hp * wp)
    ii = rr // wp
    jj = rr % wp
    valid = (pos < m_out) & (ii < oh1) & (jj < ow1)
    if stride > 1:
        valid = valid & (ii % stride == 0) & (jj % stride == 0)
    mask = valid.astype(jnp.float32)[None, :]                              # (1, m_pad)

    # ---- Kernel A: conv + channel statistics ----------------------------------
    kern_a = functools.partial(_conv_stats_kernel, kh=kh, kw=kw, wp=wp, tm=tm)
    yT, ch_sum, ch_sumsq = pl.pallas_call(
        kern_a,
        out_shape=(
            jax.ShapeDtypeStruct((cout_p, m_pad), jnp.float32),
            jax.ShapeDtypeStruct((cout_p, 1), jnp.float32),
            jax.ShapeDtypeStruct((cout_p, 1), jnp.float32),
        ),
        grid_spec=pltpu.PrefetchScalarGridSpec(
            num_scalar_prefetch=0,
            grid=(grid_m,),
            in_specs=[
                pl.BlockSpec((cin_p, tm), lambda i: (0, i)),          # window, tile i
                pl.BlockSpec((cin_p, tm), lambda i: (0, i + 1)),      # window, tile i+1
                pl.BlockSpec((kh * kw, cout_p, cin_p), lambda i: (0, 0, 0)),  # resident
                pl.BlockSpec((1, tm), lambda i: (0, i)),              # validity mask
            ],
            out_specs=[
                pl.BlockSpec((cout_p, tm), lambda i: (0, i)),         # lane-dense output
                pl.BlockSpec((cout_p, 1), lambda i: (0, 0)),          # resident accumulator
                pl.BlockSpec((cout_p, 1), lambda i: (0, 0)),          # resident accumulator
            ],
        ),
        compiler_params=pltpu.CompilerParams(
            dimension_semantics=("arbitrary",),
            vmem_limit_bytes=48 * 1024 * 1024),
    )(xfT, xfT, wstack, mask)

    # ---- tiny per-channel scalar math (glue) ----------------------------------
    m_valid = jnp.float32(n * oh * ow)
    mean = ch_sum / m_valid                                   # (Cout_p, 1)
    var = jnp.maximum(ch_sumsq / m_valid - mean * mean, 0.0)  # clamp fp cancellation
    inv = lax.rsqrt(var + eps)
    gamma_p = jnp.pad(gamma.astype(jnp.float32), (0, cout_p - cout))[:, None]
    beta_p = jnp.pad(beta.astype(jnp.float32), (0, cout_p - cout))[:, None]
    scale = gamma_p * inv
    shift = beta_p - mean * scale

    # ---- Kernel B: BN affine + LeakyReLU, in place over yT ---------------------
    outT = pl.pallas_call(
        _bn_act_kernel,
        out_shape=jax.ShapeDtypeStruct((cout_p, m_pad), jnp.float32),
        grid_spec=pltpu.PrefetchScalarGridSpec(
            num_scalar_prefetch=0,
            grid=(grid_m,),
            in_specs=[
                pl.BlockSpec((cout_p, tm), lambda i: (0, i)),
                pl.BlockSpec((cout_p, 1), lambda i: (0, 0)),
                pl.BlockSpec((cout_p, 1), lambda i: (0, 0)),
            ],
            out_specs=pl.BlockSpec((cout_p, tm), lambda i: (0, i)),
        ),
        input_output_aliases={0: 0},
        compiler_params=pltpu.CompilerParams(
            dimension_semantics=("parallel",),
            vmem_limit_bytes=48 * 1024 * 1024),
    )(yT, scale, shift)

    # ---- output-sized glue: pick valid (strided) positions, go back to NCHW ----
    yt = outT[:cout, :m_out].reshape(cout, n, hp, wp)
    yt = yt[:, :, 0:oh1:stride, 0:ow1:stride]                 # (Cout, N, OH, OW)
    return jnp.transpose(yt, (1, 0, 2, 3))                    # -> NCHW


def _reference(x, weight, gamma, beta, stride, padding):
    """Pure-JAX reference (precision-matched: bf16-rounded conv operands)."""
    xb = x.astype(jnp.bfloat16).astype(jnp.float32)
    wb = weight.astype(jnp.bfloat16).astype(jnp.float32)
    y = lax.conv_general_dilated(
        xb, wb, window_strides=(stride, stride),
        padding=[(padding, padding), (padding, padding)],
        dimension_numbers=("NCHW", "OIHW", "NCHW"))
    mean = jnp.mean(y, axis=(0, 2, 3), keepdims=True)
    var = jnp.maximum(jnp.mean(y * y, axis=(0, 2, 3), keepdims=True) - mean * mean, 0.0)
    inv = lax.rsqrt(var + jnp.float32(1e-5))
    t = (y - mean) * inv * gamma[None, :, None, None] + beta[None, :, None, None]
    return jnp.where(t >= 0, t, 0.2 * t)


if __name__ == "__main__":
    # Convolution(in_channels=4, out_channels=8, kernel_size=3, stride=1, padding=1)
    N, CIN, COUT, H, W = 2, 4, 8, 16, 16
    KH = KW = 3
    STRIDE, PADDING = 1, 1

    key = jax.random.PRNGKey(0)
    kx, kw_, kg, kb = jax.random.split(key, 4)
    x = jax.random.normal(kx, (N, CIN, H, W), dtype=jnp.float32)
    weight = jax.random.normal(kw_, (COUT, CIN, KH, KW), dtype=jnp.float32) * 0.1
    gamma = jax.random.uniform(kg, (COUT,), dtype=jnp.float32, minval=0.5, maxval=1.5)
    beta = jax.random.normal(kb, (COUT,), dtype=jnp.float32) * 0.1

    out = convolution_forward(x, weight, gamma, beta, stride=STRIDE, padding=PADDING)
    out = jax.block_until_ready(out)

    ref = _reference(x, weight, gamma, beta, STRIDE, PADDING)
    assert out.shape == (N, COUT, H, W), out.shape
    np.testing.assert_allclose(np.asarray(out), np.asarray(ref), rtol=2e-3, atol=2e-3)

    print("KERNEL_OK")
</pallas_src>

<mosaic_0001>
module attributes {stable_mosaic.version = 11 : i64} {
  func.func @_conv_stats_kernel(%arg0: i32, %arg1: memref<8x512xbf16, #tpu.memory_space<vmem>>, %arg2: memref<8x512xbf16, #tpu.memory_space<vmem>>, %arg3: memref<9x8x8xf32, #tpu.memory_space<vmem>>, %arg4: memref<1x512xf32, #tpu.memory_space<vmem>>, %arg5: memref<8x512xf32, #tpu.memory_space<vmem>>, %arg6: memref<8x1xf32, #tpu.memory_space<vmem>>, %arg7: memref<8x1xf32, #tpu.memory_space<vmem>>) attributes {dimension_semantics = [#tpu.dimension_semantics<arbitrary>], iteration_bounds = array<i64: 2>, scalar_prefetch = 0 : i64, scratch_operands = 0 : i64, tpu.core_type = #tpu.core_type<tc>, window_params = [{transform_indices = @transform_0, window_bounds = array<i64: 8, 512>}, {transform_indices = @transform_1, window_bounds = array<i64: 8, 512>}, {pipeline_mode = #tpu.pipeline_mode<synchronous>, transform_indices = @transform_2, window_bounds = array<i64: 9, 8, 8>}, {transform_indices = @transform_3, window_bounds = array<i64: 1, 512>}, {transform_indices = @transform_4, window_bounds = array<i64: 8, 512>}, {pipeline_mode = #tpu.pipeline_mode<synchronous>, transform_indices = @transform_5, window_bounds = array<i64: 8, 1>}, {pipeline_mode = #tpu.pipeline_mode<synchronous>, transform_indices = @transform_6, window_bounds = array<i64: 8, 1>}]} {
    %c0 = arith.constant 0 : index
    %c0_0 = arith.constant 0 : index
    %0 = vector.load %arg1[%c0, %c0_0] : memref<8x512xbf16, #tpu.memory_space<vmem>>, vector<8x512xbf16>
    %c0_1 = arith.constant 0 : index
    %c0_2 = arith.constant 0 : index
    %1 = vector.load %arg2[%c0_1, %c0_2] : memref<8x512xbf16, #tpu.memory_space<vmem>>, vector<8x512xbf16>
    %2 = tpu.concatenate %0, %1 in 1 : vector<8x512xbf16>, vector<8x512xbf16> -> vector<8x1024xbf16>
    %cst = arith.constant 0.000000e+00 : f32
    %3 = vector.broadcast %cst : f32 to vector<8x512xf32>
    %4 = vector.extract_strided_slice %2 {offsets = [0, 0], sizes = [8, 512], strides = [1, 1]} : vector<8x1024xbf16> to vector<8x512xbf16>
    %c0_3 = arith.constant 0 : index
    %c0_4 = arith.constant 0 : index
    %c0_5 = arith.constant 0 : index
    %5 = vector.load %arg3[%c0_3, %c0_4, %c0_5] : memref<9x8x8xf32, #tpu.memory_space<vmem>>, vector<1x8x8xf32>
    %6 = vector.shape_cast %5 : vector<1x8x8xf32> to vector<8x8xf32>
    %7 = arith.truncf %6 : vector<8x8xf32> to vector<8x8xbf16>
    %cst_6 = arith.constant dense<0.000000e+00> : vector<8x512xf32>
    %8 = tpu.matmul %7, %4, %cst_6 {dimension_numbers = #tpu.dot_dimension_numbers<[1], [0], [0], [1], [0, 0, 1, 1], [], []>} : vector<8x8xbf16>, vector<8x512xbf16>, vector<8x512xf32> -> vector<8x512xf32>
    %9 = arith.addf %3, %8 : vector<8x512xf32>
    %10 = vector.extract_strided_slice %2 {offsets = [0, 1], sizes = [8, 512], strides = [1, 1]} : vector<8x1024xbf16> to vector<8x512xbf16>
    %c1 = arith.constant 1 : index
    %c0_7 = arith.constant 0 : index
    %c0_8 = arith.constant 0 : index
    %11 = vector.load %arg3[%c1, %c0_7, %c0_8] : memref<9x8x8xf32, #tpu.memory_space<vmem>>, vector<1x8x8xf32>
    %12 = vector.shape_cast %11 : vector<1x8x8xf32> to vector<8x8xf32>
    %13 = arith.truncf %12 : vector<8x8xf32> to vector<8x8xbf16>
    %cst_9 = arith.constant dense<0.000000e+00> : vector<8x512xf32>
    %14 = tpu.matmul %13, %10, %cst_9 {dimension_numbers = #tpu.dot_dimension_numbers<[1], [0], [0], [1], [0, 0, 1, 1], [], []>} : vector<8x8xbf16>, vector<8x512xbf16>, vector<8x512xf32> -> vector<8x512xf32>
    %15 = arith.addf %9, %14 : vector<8x512xf32>
    %16 = vector.extract_strided_slice %2 {offsets = [0, 2], sizes = [8, 512], strides = [1, 1]} : vector<8x1024xbf16> to vector<8x512xbf16>
    %c2 = arith.constant 2 : index
    %c0_10 = arith.constant 0 : index
    %c0_11 = arith.constant 0 : index
    %17 = vector.load %arg3[%c2, %c0_10, %c0_11] : memref<9x8x8xf32, #tpu.memory_space<vmem>>, vector<1x8x8xf32>
    %18 = vector.shape_cast %17 : vector<1x8x8xf32> to vector<8x8xf32>
    %19 = arith.truncf %18 : vector<8x8xf32> to vector<8x8xbf16>
    %cst_12 = arith.constant dense<0.000000e+00> : vector<8x512xf32>
    %20 = tpu.matmul %19, %16, %cst_12 {dimension_numbers = #tpu.dot_dimension_numbers<[1], [0], [0], [1], [0, 0, 1, 1], [], []>} : vector<8x8xbf16>, vector<8x512xbf16>, vector<8x512xf32> -> vector<8x512xf32>
    %21 = arith.addf %15, %20 : vector<8x512xf32>
    %22 = vector.extract_strided_slice %2 {offsets = [0, 18], sizes = [8, 512], strides = [1, 1]} : vector<8x1024xbf16> to vector<8x512xbf16>
    %c3 = arith.constant 3 : index
    %c0_13 = arith.constant 0 : index
    %c0_14 = arith.constant 0 : index
    %23 = vector.load %arg3[%c3, %c0_13, %c0_14] : memref<9x8x8xf32, #tpu.memory_space<vmem>>, vector<1x8x8xf32>
    %24 = vector.shape_cast %23 : vector<1x8x8xf32> to vector<8x8xf32>
    %25 = arith.truncf %24 : vector<8x8xf32> to vector<8x8xbf16>
    %cst_15 = arith.constant dense<0.000000e+00> : vector<8x512xf32>
    %26 = tpu.matmul %25, %22, %cst_15 {dimension_numbers = #tpu.dot_dimension_numbers<[1], [0], [0], [1], [0, 0, 1, 1], [], []>} : vector<8x8xbf16>, vector<8x512xbf16>, vector<8x512xf32> -> vector<8x512xf32>
    %27 = arith.addf %21, %26 : vector<8x512xf32>
    %28 = vector.extract_strided_slice %2 {offsets = [0, 19], sizes = [8, 512], strides = [1, 1]} : vector<8x1024xbf16> to vector<8x512xbf16>
    %c4 = arith.constant 4 : index
    %c0_16 = arith.constant 0 : index
    %c0_17 = arith.constant 0 : index
    %29 = vector.load %arg3[%c4, %c0_16, %c0_17] : memref<9x8x8xf32, #tpu.memory_space<vmem>>, vector<1x8x8xf32>
    %30 = vector.shape_cast %29 : vector<1x8x8xf32> to vector<8x8xf32>
    %31 = arith.truncf %30 : vector<8x8xf32> to vector<8x8xbf16>
    %cst_18 = arith.constant dense<0.000000e+00> : vector<8x512xf32>
    %32 = tpu.matmul %31, %28, %cst_18 {dimension_numbers = #tpu.dot_dimension_numbers<[1], [0], [0], [1], [0, 0, 1, 1], [], []>} : vector<8x8xbf16>, vector<8x512xbf16>, vector<8x512xf32> -> vector<8x512xf32>
    %33 = arith.addf %27, %32 : vector<8x512xf32>
    %34 = vector.extract_strided_slice %2 {offsets = [0, 20], sizes = [8, 512], strides = [1, 1]} : vector<8x1024xbf16> to vector<8x512xbf16>
    %c5 = arith.constant 5 : index
    %c0_19 = arith.constant 0 : index
    %c0_20 = arith.constant 0 : index
    %35 = vector.load %arg3[%c5, %c0_19, %c0_20] : memref<9x8x8xf32, #tpu.memory_space<vmem>>, vector<1x8x8xf32>
    %36 = vector.shape_cast %35 : vector<1x8x8xf32> to vector<8x8xf32>
    %37 = arith.truncf %36 : vector<8x8xf32> to vector<8x8xbf16>
    %cst_21 = arith.constant dense<0.000000e+00> : vector<8x512xf32>
    %38 = tpu.matmul %37, %34, %cst_21 {dimension_numbers = #tpu.dot_dimension_numbers<[1], [0], [0], [1], [0, 0, 1, 1], [], []>} : vector<8x8xbf16>, vector<8x512xbf16>, vector<8x512xf32> -> vector<8x512xf32>
    %39 = arith.addf %33, %38 : vector<8x512xf32>
    %40 = vector.extract_strided_slice %2 {offsets = [0, 36], sizes = [8, 512], strides = [1, 1]} : vector<8x1024xbf16> to vector<8x512xbf16>
    %c6 = arith.constant 6 : index
    %c0_22 = arith.constant 0 : index
    %c0_23 = arith.constant 0 : index
    %41 = vector.load %arg3[%c6, %c0_22, %c0_23] : memref<9x8x8xf32, #tpu.memory_space<vmem>>, vector<1x8x8xf32>
    %42 = vector.shape_cast %41 : vector<1x8x8xf32> to vector<8x8xf32>
    %43 = arith.truncf %42 : vector<8x8xf32> to vector<8x8xbf16>
    %cst_24 = arith.constant dense<0.000000e+00> : vector<8x512xf32>
    %44 = tpu.matmul %43, %40, %cst_24 {dimension_numbers = #tpu.dot_dimension_numbers<[1], [0], [0], [1], [0, 0, 1, 1], [], []>} : vector<8x8xbf16>, vector<8x512xbf16>, vector<8x512xf32> -> vector<8x512xf32>
    %45 = arith.addf %39, %44 : vector<8x512xf32>
    %46 = vector.extract_strided_slice %2 {offsets = [0, 37], sizes = [8, 512], strides = [1, 1]} : vector<8x1024xbf16> to vector<8x512xbf16>
    %c7 = arith.constant 7 : index
    %c0_25 = arith.constant 0 : index
    %c0_26 = arith.constant 0 : index
    %47 = vector.load %arg3[%c7, %c0_25, %c0_26] : memref<9x8x8xf32, #tpu.memory_space<vmem>>, vector<1x8x8xf32>
    %48 = vector.shape_cast %47 : vector<1x8x8xf32> to vector<8x8xf32>
    %49 = arith.truncf %48 : vector<8x8xf32> to vector<8x8xbf16>
    %cst_27 = arith.constant dense<0.000000e+00> : vector<8x512xf32>
    %50 = tpu.matmul %49, %46, %cst_27 {dimension_numbers = #tpu.dot_dimension_numbers<[1], [0], [0], [1], [0, 0, 1, 1], [], []>} : vector<8x8xbf16>, vector<8x512xbf16>, vector<8x512xf32> -> vector<8x512xf32>
    %51 = arith.addf %45, %50 : vector<8x512xf32>
    %52 = vector.extract_strided_slice %2 {offsets = [0, 38], sizes = [8, 512], strides = [1, 1]} : vector<8x1024xbf16> to vector<8x512xbf16>
    %c8 = arith.constant 8 : index
    %c0_28 = arith.constant 0 : index
    %c0_29 = arith.constant 0 : index
    %53 = vector.load %arg3[%c8, %c0_28, %c0_29] : memref<9x8x8xf32, #tpu.memory_space<vmem>>, vector<1x8x8xf32>
    %54 = vector.shape_cast %53 : vector<1x8x8xf32> to vector<8x8xf32>
    %55 = arith.truncf %54 : vector<8x8xf32> to vector<8x8xbf16>
    %cst_30 = arith.constant dense<0.000000e+00> : vector<8x512xf32>
    %56 = tpu.matmul %55, %52, %cst_30 {dimension_numbers = #tpu.dot_dimension_numbers<[1], [0], [0], [1], [0, 0, 1, 1], [], []>} : vector<8x8xbf16>, vector<8x512xbf16>, vector<8x512xf32> -> vector<8x512xf32>
    %57 = arith.addf %51, %56 : vector<8x512xf32>
    %c0_31 = arith.constant 0 : index
    %c0_32 = arith.constant 0 : index
    %58 = vector.load %arg5[%c0_31, %c0_32] : memref<8x512xf32, #tpu.memory_space<vmem>>, vector<8x512xf32>
    tpu.vector_store %arg5[%c0_31, %c0_32], %57 {strides = array<i32>} : memref<8x512xf32, #tpu.memory_space<vmem>>, vector<8x512xf32>,
    %c0_i32 = arith.constant 0 : i32
    %59 = arith.cmpi eq, %arg0, %c0_i32 : i32
    %60 = arith.extui %59 : i1 to i32
    %c0_i32_33 = arith.constant 0 : i32
    %61 = arith.cmpi ne, %60, %c0_i32_33 : i32
    scf.if %61 {
      %cst_46 = arith.constant 0.000000e+00 : f32
      %76 = vector.broadcast %cst_46 : f32 to vector<8x1xf32>
      %c0_47 = arith.constant 0 : index
      %c0_48 = arith.constant 0 : index
      %77 = vector.load %arg6[%c0_47, %c0_48] : memref<8x1xf32, #tpu.memory_space<vmem>>, vector<8x1xf32>
      tpu.vector_store %arg6[%c0_47, %c0_48], %76 {strides = array<i32>} : memref<8x1xf32, #tpu.memory_space<vmem>>, vector<8x1xf32>,
      %cst_49 = arith.constant 0.000000e+00 : f32
      %78 = vector.broadcast %cst_49 : f32 to vector<8x1xf32>
      %c0_50 = arith.constant 0 : index
      %c0_51 = arith.constant 0 : index
      %79 = vector.load %arg7[%c0_50, %c0_51] : memref<8x1xf32, #tpu.memory_space<vmem>>, vector<8x1xf32>
      tpu.vector_store %arg7[%c0_50, %c0_51], %78 {strides = array<i32>} : memref<8x1xf32, #tpu.memory_space<vmem>>, vector<8x1xf32>,
    } else {
    }
    %c0_34 = arith.constant 0 : index
    %c0_35 = arith.constant 0 : index
    %62 = vector.load %arg4[%c0_34, %c0_35] : memref<1x512xf32, #tpu.memory_space<vmem>>, vector<1x512xf32>
    %63 = vector.broadcast %62 : vector<1x512xf32> to vector<8x512xf32>
    %64 = arith.mulf %57, %63 : vector<8x512xf32>
    %c0_36 = arith.constant 0 : index
    %c0_37 = arith.constant 0 : index
    %65 = vector.load %arg6[%c0_36, %c0_37] : memref<8x1xf32, #tpu.memory_space<vmem>>, vector<8x1xf32>
    %cst_38 = arith.constant dense<0.000000e+00> : vector<8xf32>
    %66 = vector.multi_reduction <add>, %64, %cst_38 [1] : vector<8x512xf32> to vector<8xf32>
    %67 = vector.shape_cast %66 : vector<8xf32> to vector<8x1xf32>
    %68 = arith.addf %65, %67 : vector<8x1xf32>
    %c0_39 = arith.constant 0 : index
    %c0_40 = arith.constant 0 : index
    %69 = vector.load %arg6[%c0_39, %c0_40] : memref<8x1xf32, #tpu.memory_space<vmem>>, vector<8x1xf32>
    tpu.vector_store %arg6[%c0_39, %c0_40], %68 {strides = array<i32>} : memref<8x1xf32, #tpu.memory_space<vmem>>, vector<8x1xf32>,
    %c0_41 = arith.constant 0 : index
    %c0_42 = arith.constant 0 : index
    %70 = vector.load %arg7[%c0_41, %c0_42] : memref<8x1xf32, #tpu.memory_space<vmem>>, vector<8x1xf32>
    %71 = arith.mulf %64, %57 : vector<8x512xf32>
    %cst_43 = arith.constant dense<0.000000e+00> : vector<8xf32>
    %72 = vector.multi_reduction <add>, %71, %cst_43 [1] : vector<8x512xf32> to vector<8xf32>
    %73 = vector.shape_cast %72 : vector<8xf32> to vector<8x1xf32>
    %74 = arith.addf %70, %73 : vector<8x1xf32>
    %c0_44 = arith.constant 0 : index
    %c0_45 = arith.constant 0 : index
    %75 = vector.load %arg7[%c0_44, %c0_45] : memref<8x1xf32, #tpu.memory_space<vmem>>, vector<8x1xf32>
    tpu.vector_store %arg7[%c0_44, %c0_45], %74 {strides = array<i32>} : memref<8x1xf32, #tpu.memory_space<vmem>>, vector<8x1xf32>,
    return
  }
  func.func @transform_0(%arg0: i32) -> (i32, i32) {
    %c0_i32 = arith.constant 0 : i32
    %c0_i32_0 = arith.constant 0 : i32
    return %c0_i32, %arg0 : i32, i32
  }
  func.func @transform_1(%arg0: i32) -> (i32, i32) {
    %c1_i32 = arith.constant 1 : i32
    %0 = arith.addi %arg0, %c1_i32 : i32
    %c0_i32 = arith.constant 0 : i32
    %c0_i32_0 = arith.constant 0 : i32
    return %c0_i32, %0 : i32, i32
  }
  func.func @transform_2(%arg0: i32) -> (i32, i32, i32) {
    %c0_i32 = arith.constant 0 : i32
    %c0_i32_0 = arith.constant 0 : i32
    %c0_i32_1 = arith.constant 0 : i32
    %c0_i32_2 = arith.constant 0 : i32
    return %c0_i32, %c0_i32_0, %c0_i32_1 : i32, i32, i32
  }
  func.func @transform_3(%arg0: i32) -> (i32, i32) {
    %c0_i32 = arith.constant 0 : i32
    %c0_i32_0 = arith.constant 0 : i32
    return %c0_i32, %arg0 : i32, i32
  }
  func.func @transform_4(%arg0: i32) -> (i32, i32) {
    %c0_i32 = arith.constant 0 : i32
    %c0_i32_0 = arith.constant 0 : i32
    return %c0_i32, %arg0 : i32, i32
  }
  func.func @transform_5(%arg0: i32) -> (i32, i32) {
    %c0_i32 = arith.constant 0 : i32
    %c0_i32_0 = arith.constant 0 : i32
    %c0_i32_1 = arith.constant 0 : i32
    return %c0_i32, %c0_i32_0 : i32, i32
  }
  func.func @transform_6(%arg0: i32) -> (i32, i32) {
    %c0_i32 = arith.constant 0 : i32
    %c0_i32_0 = arith.constant 0 : i32
    %c0_i32_1 = arith.constant 0 : i32
    return %c0_i32, %c0_i32_0 : i32, i32
  }
}

module attributes {stable_mosaic.version = 11 : i64} {
  func.func @_bn_act_kernel(%arg0: i32, %arg1: memref<8x512xf32, #tpu.memory_space<vmem>>, %arg2: memref<8x1xf32, #tpu.memory_space<vmem>>, %arg3: memref<8x1xf32, #tpu.memory_space<vmem>>, %arg4: memref<8x512xf32, #tpu.memory_space<vmem>>) attributes {dimension_semantics = [#tpu.dimension_semantics<parallel>], iteration_bounds = array<i64: 2>, scalar_prefetch = 0 : i64, scratch_operands = 0 : i64, tpu.core_type = #tpu.core_type<tc>, window_params = [{transform_indices = @transform_0, window_bounds = array<i64: 8, 512>}, {pipeline_mode = #tpu.pipeline_mode<synchronous>, transform_indices = @transform_1, window_bounds = array<i64: 8, 1>}, {pipeline_mode = #tpu.pipeline_mode<synchronous>, transform_indices = @transform_2, window_bounds = array<i64: 8, 1>}, {transform_indices = @transform_3, window_bounds = array<i64: 8, 512>}]} {
    %c0 = arith.constant 0 : index
    %c0_0 = arith.constant 0 : index
    %0 = vector.load %arg1[%c0, %c0_0] : memref<8x512xf32, #tpu.memory_space<vmem>>, vector<8x512xf32>
    %c0_1 = arith.constant 0 : index
    %c0_2 = arith.constant 0 : index
    %1 = vector.load %arg2[%c0_1, %c0_2] : memref<8x1xf32, #tpu.memory_space<vmem>>, vector<8x1xf32>
    %2 = vector.broadcast %1 : vector<8x1xf32> to vector<8x512xf32>
    %3 = arith.mulf %0, %2 : vector<8x512xf32>
    %c0_3 = arith.constant 0 : index
    %c0_4 = arith.constant 0 : index
    %4 = vector.load %arg3[%c0_3, %c0_4] : memref<8x1xf32, #tpu.memory_space<vmem>>, vector<8x1xf32>
    %5 = vector.broadcast %4 : vector<8x1xf32> to vector<8x512xf32>
    %6 = arith.addf %3, %5 : vector<8x512xf32>
    %cst = arith.constant 0.000000e+00 : f32
    %7 = vector.broadcast %cst : f32 to vector<8x512xf32>
    %8 = arith.cmpf oge, %6, %7 : vector<8x512xf32>
    %cst_5 = arith.constant 2.000000e-01 : f32
    %9 = vector.broadcast %cst_5 : f32 to vector<8x512xf32>
    %10 = arith.mulf %9, %6 : vector<8x512xf32>
    %11 = arith.select %8, %6, %10 : vector<8x512xi1>, vector<8x512xf32>
    %c0_6 = arith.constant 0 : index
    %c0_7 = arith.constant 0 : index
    %12 = vector.load %arg4[%c0_6, %c0_7] : memref<8x512xf32, #tpu.memory_space<vmem>>, vector<8x512xf32>
    tpu.vector_store %arg4[%c0_6, %c0_7], %11 {strides = array<i32>} : memref<8x512xf32, #tpu.memory_space<vmem>>, vector<8x512xf32>,
    return
  }
  func.func @transform_0(%arg0: i32) -> (i32, i32) {
    %c0_i32 = arith.constant 0 : i32
    %c0_i32_0 = arith.constant 0 : i32
    return %c0_i32, %arg0 : i32, i32
  }
  func.func @transform_1(%arg0: i32) -> (i32, i32) {
    %c0_i32 = arith.constant 0 : i32
    %c0_i32_0 = arith.constant 0 : i32
    %c0_i32_1 = arith.constant 0 : i32
    return %c0_i32, %c0_i32_0 : i32, i32
  }
  func.func @transform_2(%arg0: i32) -> (i32, i32) {
    %c0_i32 = arith.constant 0 : i32
    %c0_i32_0 = arith.constant 0 : i32
    %c0_i32_1 = arith.constant 0 : i32
    return %c0_i32, %c0_i32_0 : i32, i32
  }
  func.func @transform_3(%arg0: i32) -> (i32, i32) {
    %c0_i32 = arith.constant 0 : i32
    %c0_i32_0 = arith.constant 0 : i32
    return %c0_i32, %arg0 : i32, i32
  }
}

</mosaic_0001>

<llo_original>
// kernel: convolution_forward.3
$region0: #{convolution_forward.3}
  #allocation0 [shape = 'u32[]', space=smem, size = 0x4, offset = 0x4, fixed_abs, tag = 'smem constant byte address 0x4 - core index']
  #allocation1 [shape = 'u32[72,128]{1,0:T(1,128)}', space=vmem, size = 0x9000, scoped, tag = 'internal scratch']
  %s0 = inlined_call_operand.vmem [shape: f32[8,1024], index: 0, kind: input, shape index: {}, may-alias: {0,3}]
  %s1 = inlined_call_operand.vmem [shape: f32[8,1], index: 1, kind: input, shape index: {}]
  %s2 = inlined_call_operand.vmem [shape: f32[8,1], index: 2, kind: input, shape index: {}]
  %s3 = inlined_call_operand.vmem [shape: f32[8,1024], index: 3, kind: output, shape index: {}, may-alias: {0,3}]
  %s4 = sld [smem:[#allocation0]]
  $region45: #{convolution_forward.3} parent=0
    _
  %s6 = ssub.s32 1, %s4
  %s7 = scalar_select 0, %s6, %s4
  loop: start=0, step=1, limit=4
  $region2: #{convolution_forward.3} parent=0 // loop_pre_header
    _
  $region3: #{convolution_forward.3} parent=0 // loop_header
    %s9 = sphi 0, %s13
    %p10 = scmp.ge.s32.totalorder %s9, 4
    %s19 = sphi 0, %s21
    %s22 = sphi 0, %s19
    %s23 = sphi 0, %s22
    %s39 = sphi 0, %s23
    %s43 = sphi 0, %s43
    %s45 = sphi 0, %s43
    %s46 = sphi 0, %s45
    %s60 = sphi 0, %s46
    %s64 = sphi 0, %s64
    %s66 = sphi 0, %s64
    %s67 = sphi 0, %s66
    %s81 = sphi 0, %s67
    %s87 = sphi 0, %s89
    %s90 = sphi 0, %s87
    %s91 = sphi 0, %s90
    %s107 = sphi 0, %s91
  $region4: #{convolution_forward.3} parent=0 // loop_header_branch
    %12 = sbr.rel (%p10) target = $region8
  $region5: #{convolution_forward.3} parent=0 // loop_body
    %s14 = ssub.s32 %s9, 1
    %s15 = ssub.s32 %s9, 2
    %s16 = sadd.s32 %s9, 1
    %s17 = ssub.s32 %s9, %s16
    %p18 = scmp.eq.s32.totalorder %s17, 0
    %s20 = sadd.s32 %s19, 1
    %s21 = scalar_select %p18, %s19, %s20
    %p24 = pneg %p18
    %p25 = scmp.eq.s32.totalorder %s9, 1
    %p26 = por %p24, %p25
    %p27 = scmp.ne.s32.totalorder %s19, %s22
    %p28 = scmp.eq.s32.totalorder %s9, 0
    %p29 = por %p27, %p28
    %p30 = scmp.ne.s32.totalorder %s19, %s22
    %p31 = scmp.eq.s32.totalorder %s14, 1
    %p32 = por %p30, %p31
    %p33 = scmp.ne.s32.totalorder %s22, %s23
    %p34 = scmp.eq.s32.totalorder %s14, 0
    %p35 = por %p33, %p34
    %p36 = scmp.ne.s32.totalorder %s22, %s23
    %p37 = scmp.eq.s32.totalorder %s15, 1
    %p38 = por %p36, %p37
    %p40 = scmp.ne.s32.totalorder %s23, %s39
    %p41 = scmp.eq.s32.totalorder %s15, 0
    %p42 = por %p40, %p41
    %s44 = sadd.s32 %s43, 1
    %p47 = scmp.eq.s32.totalorder %s9, 1
    %p48 = scmp.ne.s32.totalorder %s43, %s45
    %p49 = scmp.eq.s32.totalorder %s9, 0
    %p50 = por %p48, %p49
    %p51 = scmp.ne.s32.totalorder %s43, %s45
    %p52 = scmp.eq.s32.totalorder %s14, 1
    %p53 = por %p51, %p52
    %p54 = scmp.ne.s32.totalorder %s45, %s46
    %p55 = scmp.eq.s32.totalorder %s14, 0
    %p56 = por %p54, %p55
    %p57 = scmp.ne.s32.totalorder %s45, %s46
    %p58 = scmp.eq.s32.totalorder %s15, 1
    %p59 = por %p57, %p58
    %p61 = scmp.ne.s32.totalorder %s46, %s60
    %p62 = scmp.eq.s32.totalorder %s15, 0
    %p63 = por %p61, %p62
    %s65 = sadd.s32 %s64, 1
    %p68 = scmp.eq.s32.totalorder %s9, 1
    %p69 = scmp.ne.s32.totalorder %s64, %s66
    %p70 = scmp.eq.s32.totalorder %s9, 0
    %p71 = por %p69, %p70
    %p72 = scmp.ne.s32.totalorder %s64, %s66
    %p73 = scmp.eq.s32.totalorder %s14, 1
    %p74 = por %p72, %p73
    %p75 = scmp.ne.s32.totalorder %s66, %s67
    %p76 = scmp.eq.s32.totalorder %s14, 0
    %p77 = por %p75, %p76
    %p78 = scmp.ne.s32.totalorder %s66, %s67
    %p79 = scmp.eq.s32.totalorder %s15, 1
    %p80 = por %p78, %p79
    %p82 = scmp.ne.s32.totalorder %s67, %s81
    %p83 = scmp.eq.s32.totalorder %s15, 0
    %p84 = por %p82, %p83
    %s85 = ssub.s32 %s9, %s16
    %p86 = scmp.eq.s32.totalorder %s85, 0
    %s88 = sadd.s32 %s87, 1
    %s89 = scalar_select %p86, %s87, %s88
    %p92 = pneg %p86
    %p93 = scmp.eq.s32.totalorder %s9, 1
    %p94 = por %p92, %p93
    %p95 = scmp.ne.s32.totalorder %s87, %s90
    %p96 = scmp.eq.s32.totalorder %s9, 0
    %p97 = por %p95, %p96
    %p98 = scmp.ne.s32.totalorder %s87, %s90
    %p99 = scmp.eq.s32.totalorder %s14, 1
    %p100 = por %p98, %p99
    %p101 = scmp.ne.s32.totalorder %s90, %s91
    %p102 = scmp.eq.s32.totalorder %s14, 0
    %p103 = por %p101, %p102
    %p104 = scmp.ne.s32.totalorder %s90, %s91
    %p105 = scmp.eq.s32.totalorder %s15, 1
    %p106 = por %p104, %p105
    %p108 = scmp.ne.s32.totalorder %s91, %s107
    %p109 = scmp.eq.s32.totalorder %s15, 0
    %p110 = por %p108, %p109
    %p111 = scmp.le.s32.totalorder 1, %s9
    %p112 = scmp.lt.s32.totalorder %s9, 3
    %p113 = pnand %p111, %p112
    %p114 = pneg %p113
    // Predicated region
    $region9: #{convolution_forward.3} parent=5 // pred_check
      _
    $region10: #{convolution_forward.3} parent=5 // pred_check_branch
      %116 = sbr.rel (%p113) target = $region12
    $region11: #{convolution_forward.3} parent=5 // pred_region
      %s117 = ssub.s32 %s9, 1
      // Predicated region
      $region13: #{convolution_forward.3} parent=11 // pred_check
        %p118 = pneg %p56
      $region14: #{convolution_forward.3} parent=11 // pred_check_branch
        %120 = sbr.rel (%p118) target = $region16
      $region15: #{convolution_forward.3} parent=11 // pred_region
        _
      $region16: #{convolution_forward.3} parent=11 // pred_fallthru
        _
      // Predicated region
      $region17: #{convolution_forward.3} parent=11 // pred_check
        %p121 = pneg %p77
      $region18: #{convolution_forward.3} parent=11 // pred_check_branch
        %123 = sbr.rel (%p121) target = $region20
      $region19: #{convolution_forward.3} parent=11 // pred_region
        _
      $region20: #{convolution_forward.3} parent=11 // pred_fallthru
        _
    $region12: #{convolution_forward.3} parent=5 // pred_fallthru
      _
    %p124 = scmp.lt.s32.totalorder %s9, 2
    // Predicated region
    $region21: #{convolution_forward.3} parent=5 // pred_check
      %p125 = pneg %p124
    $region22: #{convolution_forward.3} parent=5 // pred_check_branch
      %127 = sbr.rel (%p125) target = $region24
    $region23: #{convolution_forward.3} parent=5 // pred_region
      // Predicated region
      $region25: #{convolution_forward.3} parent=23 // pred_check
        %p128 = pneg %p29
      $region26: #{convolution_forward.3} parent=23 // pred_check_branch
        %130 = sbr.rel (%p128) target = $region28
      $region27: #{convolution_forward.3} parent=23 // pred_region
        %s131 = smul.u32 4, %s9
        %p132 = scmp.lt.s32.totalorder %s131, 7
        %s133 = scalar_select %p132, %s131, 7
        %s134 = smul.addr %s133, 8
        %s135 = scalar_lea.vmem %s0, %s134
        %s136 = smul.u32 4, %s9
      $region28: #{convolution_forward.3} parent=23 // pred_fallthru
        _
    $region24: #{convolution_forward.3} parent=5 // pred_fallthru
      _
    %p137 = scmp.le.s32.totalorder 1, %s9
    %p138 = scmp.lt.s32.totalorder %s9, 3
    %p139 = pnand %p137, %p138
    %p140 = pneg %p139
    // Predicated region
    $region29: #{convolution_forward.3} parent=5 // pred_check
      _
    $region30: #{convolution_forward.3} parent=5 // pred_check_branch
      %142 = sbr.rel (%p139) target = $region32
    $region31: #{convolution_forward.3} parent=5 // pred_region
      %s143 = ssub.s32 %s9, 1
      %s144 = smul.u32 4, %s14
      %p145 = scmp.lt.s32.totalorder %s144, 7
      %s146 = scalar_select %p145, %s144, 7
      %s147 = smul.addr %s146, 8
      %s148 = scalar_lea.vmem %s0, %s147
      %p149 = pneg %p35
      %p150 = pneg %p32
      %p151 = pneg %p56
      %p152 = pneg %p53
      %p153 = pneg %p77
      %p154 = pneg %p74
      %p155 = pneg %p103
      %p156 = pneg %p100
      %s157 = smul.u32 4, %s14
      %p158 = scmp.lt.s32.totalorder %s157, 7
      %s159 = scalar_select %p158, %s157, 7
      %s160 = smul.addr %s159, 8
      %s161 = scalar_lea.vmem %s3, %s160
      %s162 = smul.u32 4, %s14
      %p163 = scmp.lt.s32.totalorder %s162, 7
      %s164 = scalar_select %p163, %s162, 7
      %s165 = smul.addr %s164, 8
      %s166 = scalar_lea.vmem %s0, %s165
      %s167 = smul.u32 4, %s14
      %s168 = smul.u32 4, %s14
      %p169 = scmp.lt.s32.totalorder %s168, 7
      %s170 = scalar_select %p169, %s168, 7
      %s171 = smul.addr %s170, 8
      %s172 = scalar_lea.vmem %s3, %s171
      %s173 = smul.u32 4, %s14
      %v174 = vld [vmem:[%s166] sm:$0xff]
      %v175 = vld [vmem:[%s166 + $0x8] sm:$0xff]
      %v176 = vld [vmem:[%s166 + $0x10] sm:$0xff]
      %v177 = vld [vmem:[%s166 + $0x18] sm:$0xff]
      %v178 = vld [vmem:[%s1] sm:$0xff]
      %180 = vset.pattern.permute.xlu0 0
      %181 = vperm.xlu0 %180, %v178
      %v182 = vpop.permute.xlu0 %181
      %v184 = vmul.f32 %v174, %v182
      %v185 = vmul.f32 %v175, %v182
      %v186 = vmul.f32 %v176, %v182
      %v187 = vmul.f32 %v177, %v182
      %v188 = vld [vmem:[%s2] sm:$0xff]
      %190 = vset.pattern.permute.xlu0 0
      %191 = vperm.xlu0 %190, %v188
      %v192 = vpop.permute.xlu0 %191
      %v194 = vadd.f32 %v184, %v192
      %v195 = vadd.f32 %v185, %v192
      %v196 = vadd.f32 %v186, %v192
      %v197 = vadd.f32 %v187, %v192
      %vm198 = vcmp.ge.f32.partialorder %v194, 0.0
      %vm199 = vcmp.ge.f32.partialorder %v195, 0.0
      %vm200 = vcmp.ge.f32.partialorder %v196, 0.0
      %vm201 = vcmp.ge.f32.partialorder %v197, 0.0
      %v202 = vmul.f32 %v194, 0.2
      %v203 = vmul.f32 %v195, 0.2
      %v204 = vmul.f32 %v196, 0.2
      %v205 = vmul.f32 %v197, 0.2
      %v206 = vsel %vm198, %v194, %v202
      %v207 = vsel %vm199, %v195, %v203
      %v208 = vsel %vm200, %v196, %v204
      %v209 = vsel %vm201, %v197, %v205
      %210 = vst [vmem:[%s172] sm:$0xff] %v206
      %211 = vst [vmem:[%s172 + $0x8] sm:$0xff] %v207
      %212 = vst [vmem:[%s172 + $0x10] sm:$0xff] %v208
      %213 = vst [vmem:[%s172 + $0x18] sm:$0xff] %v209
      %s214 = smul.u32 4, %s14
      %p215 = scmp.lt.s32.totalorder %s214, 7
      %s216 = scalar_select %p215, %s214, 7
      %s217 = smul.addr %s216, 8
      %s218 = scalar_lea.vmem %s3, %s217
      // Predicated region
      $region33: #{convolution_forward.3} parent=31 // pred_check
        %p219 = pneg %p100
      $region34: #{convolution_forward.3} parent=31 // pred_check_branch
        %221 = sbr.rel (%p219) target = $region36
      $region35: #{convolution_forward.3} parent=31 // pred_region
        %s222 = smul.u32 4, %s14
      $region36: #{convolution_forward.3} parent=31 // pred_fallthru
        _
    $region32: #{convolution_forward.3} parent=5 // pred_fallthru
      _
    %p223 = scmp.le.s32.totalorder 2, %s9
    // Predicated region
    $region37: #{convolution_forward.3} parent=5 // pred_check
      %p224 = pneg %p223
    $region38: #{convolution_forward.3} parent=5 // pred_check_branch
      %226 = sbr.rel (%p224) target = $region40
    $region39: #{convolution_forward.3} parent=5 // pred_region
      %s227 = ssub.s32 %s9, 2
      // Predicated region
      $region41: #{convolution_forward.3} parent=39 // pred_check
        %p228 = pneg %p106
      $region42: #{convolution_forward.3} parent=39 // pred_check_branch
        %230 = sbr.rel (%p228) target = $region44
      $region43: #{convolution_forward.3} parent=39 // pred_region
        %s231 = smul.u32 4, %s15
        %p232 = scmp.lt.s32.totalorder %s231, 7
        %s233 = scalar_select %p232, %s231, 7
        %s234 = smul.addr %s233, 8
        %s235 = scalar_lea.vmem %s3, %s234
      $region44: #{convolution_forward.3} parent=39 // pred_fallthru
        _
    $region40: #{convolution_forward.3} parent=5 // pred_fallthru
      _
  $region6: #{convolution_forward.3} parent=0 // loop_footer
    %s13 = sadd.s32 1, %s9
  $region7: #{convolution_forward.3} parent=0 // loop_footer_branch
    %8 = sbr.rel target = $region3
  $region8: #{convolution_forward.3} parent=0 // loop_exit
    _

// kernel: convolution_forward.2
$region0: #{convolution_forward.2}
  #allocation0 [shape = 'u32[]', space=smem, size = 0x4, offset = 0x4, fixed_abs, tag = 'smem constant byte address 0x4 - core index']
  #allocation1 [shape = 'u32[72,128]{1,0:T(1,128)}', space=vmem, size = 0x9000, scoped, tag = 'internal scratch']
  %s0 = inlined_call_operand.vmem [shape: bf16[8,1536], index: 0, kind: input, shape index: {}, may-alias: {0,1}]
  %s1 = inlined_call_operand.vmem [shape: bf16[8,1536], index: 1, kind: input, shape index: {}, may-alias: {0,1}]
  %s2 = inlined_call_operand.vmem [shape: f32[9,8,8], index: 2, kind: input, shape index: {}]
  %s3 = inlined_call_operand.vmem [shape: f32[1,1024], index: 3, kind: input, shape index: {}]
  %s4 = inlined_call_operand.vmem [shape: f32[8,1024], index: 4, kind: output, shape index: {0}]
  %s5 = inlined_call_operand.vmem [shape: f32[8,1], index: 5, kind: output, shape index: {1}]
  %s6 = inlined_call_operand.vmem [shape: f32[8,1], index: 6, kind: output, shape index: {2}]
  %7 = xla_tuple %s4, %s5, %s6
  %s8 = sld [smem:[#allocation0]]
  $region69: #{convolution_forward.2} parent=0
    _
  %s10 = ssub.s32 1, %s8
  %s11 = scalar_select 0, %s10, %s8
  loop: start=0, step=1, limit=4
  $region2: #{convolution_forward.2} parent=0 // loop_pre_header
    _
  $region3: #{convolution_forward.2} parent=0 // loop_header
    %s13 = sphi 0, %s17
    %p14 = scmp.ge.s32.totalorder %s13, 4
    %s23 = sphi 0, %s25
    %s26 = sphi 0, %s23
    %s27 = sphi 0, %s26
    %s43 = sphi 0, %s27
    %s51 = sphi 0, %s53
    %s54 = sphi 0, %s51
    %s55 = sphi 0, %s54
    %s71 = sphi 0, %s55
    %s75 = sphi 0, %s75
    %s77 = sphi 0, %s75
    %s78 = sphi 0, %s77
    %s92 = sphi 0, %s78
    %s98 = sphi 0, %s100
    %s101 = sphi 0, %s98
    %s102 = sphi 0, %s101
    %s118 = sphi 0, %s102
    %s124 = sphi 0, %s126
    %s127 = sphi 0, %s124
    %s128 = sphi 0, %s127
    %s144 = sphi 0, %s128
    %s148 = sphi 0, %s148
    %s150 = sphi 0, %s148
    %s151 = sphi 0, %s150
    %s165 = sphi 0, %s151
    %s169 = sphi 0, %s169
    %s171 = sphi 0, %s169
    %s172 = sphi 0, %s171
    %s186 = sphi 0, %s172
  $region4: #{convolution_forward.2} parent=0 // loop_header_branch
    %16 = sbr.rel (%p14) target = $region8
  $region5: #{convolution_forward.2} parent=0 // loop_body
    %s18 = ssub.s32 %s13, 1
    %s19 = ssub.s32 %s13, 2
    %s20 = sadd.s32 %s13, 1
    %s21 = ssub.s32 %s13, %s20
    %p22 = scmp.eq.s32.totalorder %s21, 0
    %s24 = sadd.s32 %s23, 1
    %s25 = scalar_select %p22, %s23, %s24
    %p28 = pneg %p22
    %p29 = scmp.eq.s32.totalorder %s13, 1
    %p30 = por %p28, %p29
    %p31 = scmp.ne.s32.totalorder %s23, %s26
    %p32 = scmp.eq.s32.totalorder %s13, 0
    %p33 = por %p31, %p32
    %p34 = scmp.ne.s32.totalorder %s23, %s26
    %p35 = scmp.eq.s32.totalorder %s18, 1
    %p36 = por %p34, %p35
    %p37 = scmp.ne.s32.totalorder %s26, %s27
    %p38 = scmp.eq.s32.totalorder %s18, 0
    %p39 = por %p37, %p38
    %p40 = scmp.ne.s32.totalorder %s26, %s27
    %p41 = scmp.eq.s32.totalorder %s19, 1
    %p42 = por %p40, %p41
    %p44 = scmp.ne.s32.totalorder %s27, %s43
    %p45 = scmp.eq.s32.totalorder %s19, 0
    %p46 = por %p44, %p45
    %s47 = sadd.s32 %s13, 1
    %s48 = sadd.s32 %s20, 1
    %s49 = ssub.s32 %s47, %s48
    %p50 = scmp.eq.s32.totalorder %s49, 0
    %s52 = sadd.s32 %s51, 1
    %s53 = scalar_select %p50, %s51, %s52
    %p56 = pneg %p50
    %p57 = scmp.eq.s32.totalorder %s13, 1
    %p58 = por %p56, %p57
    %p59 = scmp.ne.s32.totalorder %s51, %s54
    %p60 = scmp.eq.s32.totalorder %s13, 0
    %p61 = por %p59, %p60
    %p62 = scmp.ne.s32.totalorder %s51, %s54
    %p63 = scmp.eq.s32.totalorder %s18, 1
    %p64 = por %p62, %p63
    %p65 = scmp.ne.s32.totalorder %s54, %s55
    %p66 = scmp.eq.s32.totalorder %s18, 0
    %p67 = por %p65, %p66
    %p68 = scmp.ne.s32.totalorder %s54, %s55
    %p69 = scmp.eq.s32.totalorder %s19, 1
    %p70 = por %p68, %p69
    %p72 = scmp.ne.s32.totalorder %s55, %s71
    %p73 = scmp.eq.s32.totalorder %s19, 0
    %p74 = por %p72, %p73
    %s76 = sadd.s32 %s75, 1
    %p79 = scmp.eq.s32.totalorder %s13, 1
    %p80 = scmp.ne.s32.totalorder %s75, %s77
    %p81 = scmp.eq.s32.totalorder %s13, 0
    %p82 = por %p80, %p81
    %p83 = scmp.ne.s32.totalorder %s75, %s77
    %p84 = scmp.eq.s32.totalorder %s18, 1
    %p85 = por %p83, %p84
    %p86 = scmp.ne.s32.totalorder %s77, %s78
    %p87 = scmp.eq.s32.totalorder %s18, 0
    %p88 = por %p86, %p87
    %p89 = scmp.ne.s32.totalorder %s77, %s78
    %p90 = scmp.eq.s32.totalorder %s19, 1
    %p91 = por %p89, %p90
    %p93 = scmp.ne.s32.totalorder %s78, %s92
    %p94 = scmp.eq.s32.totalorder %s19, 0
    %p95 = por %p93, %p94
    %s96 = ssub.s32 %s13, %s20
    %p97 = scmp.eq.s32.totalorder %s96, 0
    %s99 = sadd.s32 %s98, 1
    %s100 = scalar_select %p97, %s98, %s99
    %p103 = pneg %p97
    %p104 = scmp.eq.s32.totalorder %s13, 1
    %p105 = por %p103, %p104
    %p106 = scmp.ne.s32.totalorder %s98, %s101
    %p107 = scmp.eq.s32.totalorder %s13, 0
    %p108 = por %p106, %p107
    %p109 = scmp.ne.s32.totalorder %s98, %s101
    %p110 = scmp.eq.s32.totalorder %s18, 1
    %p111 = por %p109, %p110
    %p112 = scmp.ne.s32.totalorder %s101, %s102
    %p113 = scmp.eq.s32.totalorder %s18, 0
    %p114 = por %p112, %p113
    %p115 = scmp.ne.s32.totalorder %s101, %s102
    %p116 = scmp.eq.s32.totalorder %s19, 1
    %p117 = por %p115, %p116
    %p119 = scmp.ne.s32.totalorder %s102, %s118
    %p120 = scmp.eq.s32.totalorder %s19, 0
    %p121 = por %p119, %p120
    %s122 = ssub.s32 %s13, %s20
    %p123 = scmp.eq.s32.totalorder %s122, 0
    %s125 = sadd.s32 %s124, 1
    %s126 = scalar_select %p123, %s124, %s125
    %p129 = pneg %p123
    %p130 = scmp.eq.s32.totalorder %s13, 1
    %p131 = por %p129, %p130
    %p132 = scmp.ne.s32.totalorder %s124, %s127
    %p133 = scmp.eq.s32.totalorder %s13, 0
    %p134 = por %p132, %p133
    %p135 = scmp.ne.s32.totalorder %s124, %s127
    %p136 = scmp.eq.s32.totalorder %s18, 1
    %p137 = por %p135, %p136
    %p138 = scmp.ne.s32.totalorder %s127, %s128
    %p139 = scmp.eq.s32.totalorder %s18, 0
    %p140 = por %p138, %p139
    %p141 = scmp.ne.s32.totalorder %s127, %s128
    %p142 = scmp.eq.s32.totalorder %s19, 1
    %p143 = por %p141, %p142
    %p145 = scmp.ne.s32.totalorder %s128, %s144
    %p146 = scmp.eq.s32.totalorder %s19, 0
    %p147 = por %p145, %p146
    %s149 = sadd.s32 %s148, 1
    %p152 = scmp.eq.s32.totalorder %s13, 1
    %p153 = scmp.ne.s32.totalorder %s148, %s150
    %p154 = scmp.eq.s32.totalorder %s13, 0
    %p155 = por %p153, %p154
    %p156 = scmp.ne.s32.totalorder %s148, %s150
    %p157 = scmp.eq.s32.totalorder %s18, 1
    %p158 = por %p156, %p157
    %p159 = scmp.ne.s32.totalorder %s150, %s151
    %p160 = scmp.eq.s32.totalorder %s18, 0
    %p161 = por %p159, %p160
    %p162 = scmp.ne.s32.totalorder %s150, %s151
    %p163 = scmp.eq.s32.totalorder %s19, 1
    %p164 = por %p162, %p163
    %p166 = scmp.ne.s32.totalorder %s151, %s165
    %p167 = scmp.eq.s32.totalorder %s19, 0
    %p168 = por %p166, %p167
    %s170 = sadd.s32 %s169, 1
    %p173 = scmp.eq.s32.totalorder %s13, 1
    %p174 = scmp.ne.s32.totalorder %s169, %s171
    %p175 = scmp.eq.s32.totalorder %s13, 0
    %p176 = por %p174, %p175
    %p177 = scmp.ne.s32.totalorder %s169, %s171
    %p178 = scmp.eq.s32.totalorder %s18, 1
    %p179 = por %p177, %p178
    %p180 = scmp.ne.s32.totalorder %s171, %s172
    %p181 = scmp.eq.s32.totalorder %s18, 0
    %p182 = por %p180, %p181
    %p183 = scmp.ne.s32.totalorder %s171, %s172
    %p184 = scmp.eq.s32.totalorder %s19, 1
    %p185 = por %p183, %p184
    %p187 = scmp.ne.s32.totalorder %s172, %s186
    %p188 = scmp.eq.s32.totalorder %s19, 0
    %p189 = por %p187, %p188
    %p190 = scmp.le.s32.totalorder 1, %s13
    %p191 = scmp.lt.s32.totalorder %s13, 3
    %p192 = pnand %p190, %p191
    %p193 = pneg %p192
    // Predicated region
    $region9: #{convolution_forward.2} parent=5 // pred_check
      _
    $region10: #{convolution_forward.2} parent=5 // pred_check_branch
      %195 = sbr.rel (%p192) target = $region12
    $region11: #{convolution_forward.2} parent=5 // pred_region
      %s196 = ssub.s32 %s13, 1
      // Predicated region
      $region13: #{convolution_forward.2} parent=11 // pred_check
        %p197 = pneg %p88
      $region14: #{convolution_forward.2} parent=11 // pred_check_branch
        %199 = sbr.rel (%p197) target = $region16
      $region15: #{convolution_forward.2} parent=11 // pred_region
        _
      $region16: #{convolution_forward.2} parent=11 // pred_fallthru
        _
    $region12: #{convolution_forward.2} parent=5 // pred_fallthru
      _
    %p200 = scmp.lt.s32.totalorder %s13, 2
    // Predicated region
    $region17: #{convolution_forward.2} parent=5 // pred_check
      %p201 = pneg %p200
    $region18: #{convolution_forward.2} parent=5 // pred_check_branch
      %203 = sbr.rel (%p201) target = $region20
    $region19: #{convolution_forward.2} parent=5 // pred_region
      // Predicated region
      $region21: #{convolution_forward.2} parent=19 // pred_check
        %p204 = pneg %p33
      $region22: #{convolution_forward.2} parent=19 // pred_check_branch
        %206 = sbr.rel (%p204) target = $region24
      $region23: #{convolution_forward.2} parent=19 // pred_region
        %s207 = smul.u32 4, %s13
        %p208 = scmp.lt.s32.totalorder %s207, 11
        %s209 = scalar_select %p208, %s207, 11
        %s210 = smul.addr %s209, 4
        %s211 = scalar_lea.vmem %s0, %s210
        %s212 = smul.u32 4, %s13
      $region24: #{convolution_forward.2} parent=19 // pred_fallthru
        _
      // Predicated region
      $region25: #{convolution_forward.2} parent=19 // pred_check
        %p213 = pneg %p61
      $region26: #{convolution_forward.2} parent=19 // pred_check_branch
        %215 = sbr.rel (%p213) target = $region28
      $region27: #{convolution_forward.2} parent=19 // pred_region
        %s216 = sadd.s32 %s13, 1
        %s217 = smul.u32 4, %s216
        %p218 = scmp.lt.s32.totalorder %s217, 11
        %s219 = scalar_select %p218, %s217, 11
        %s220 = smul.addr %s219, 4
        %s221 = scalar_lea.vmem %s1, %s220
        %s222 = sadd.s32 %s13, 1
        %s223 = smul.u32 4, %s222
      $region28: #{convolution_forward.2} parent=19 // pred_fallthru
        _
      // Predicated region
      $region29: #{convolution_forward.2} parent=19 // pred_check
        %p224 = pneg %p108
      $region30: #{convolution_forward.2} parent=19 // pred_check_branch
        %226 = sbr.rel (%p224) target = $region32
      $region31: #{convolution_forward.2} parent=19 // pred_region
        %s227 = smul.u32 4, %s13
        %p228 = scmp.lt.s32.totalorder %s227, 7
        %s229 = scalar_select %p228, %s227, 7
        %s230 = scalar_lea.vmem %s3, %s229
        %s231 = smul.u32 4, %s13
      $region32: #{convolution_forward.2} parent=19 // pred_fallthru
        _
    $region20: #{convolution_forward.2} parent=5 // pred_fallthru
      _
    %p232 = scmp.le.s32.totalorder 1, %s13
    %p233 = scmp.lt.s32.totalorder %s13, 3
    %p234 = pnand %p232, %p233
    %p235 = pneg %p234
    // Predicated region
    $region33: #{convolution_forward.2} parent=5 // pred_check
      _
    $region34: #{convolution_forward.2} parent=5 // pred_check_branch
      %237 = sbr.rel (%p234) target = $region36
    $region35: #{convolution_forward.2} parent=5 // pred_region
      %s238 = ssub.s32 %s13, 1
      %s239 = smul.u32 4, %s18
      %p240 = scmp.lt.s32.totalorder %s239, 11
      %s241 = scalar_select %p240, %s239, 11
      %s242 = smul.addr %s241, 4
      %s243 = scalar_lea.vmem %s0, %s242
      %p244 = pneg %p39
      %p245 = pneg %p36
      %s246 = sadd.s32 %s18, 1
      %s247 = smul.u32 4, %s246
      %p248 = scmp.lt.s32.totalorder %s247, 11
      %s249 = scalar_select %p248, %s247, 11
      %s250 = smul.addr %s249, 4
      %s251 = scalar_lea.vmem %s1, %s250
      %p252 = pneg %p67
      %p253 = pneg %p64
      %p254 = pneg %p88
      %p255 = pneg %p85
      %s256 = smul.u32 4, %s18
      %p257 = scmp.lt.s32.totalorder %s256, 7
      %s258 = scalar_select %p257, %s256, 7
      %s259 = scalar_lea.vmem %s3, %s258
      %p260 = pneg %p114
      %p261 = pneg %p111
      %p262 = pneg %p140
      %p263 = pneg %p137
      %s264 = smul.u32 4, %s18
      %p265 = scmp.lt.s32.totalorder %s264, 7
      %s266 = scalar_select %p265, %s264, 7
      %s267 = smul.addr %s266, 8
      %s268 = scalar_lea.vmem %s4, %s267
      %p269 = pneg %p161
      %p270 = pneg %p158
      %p271 = pneg %p182
      %p272 = pneg %p179
      %s273 = smul.u32 4, %s18
      %p274 = scmp.lt.s32.totalorder %s273, 11
      %s275 = scalar_select %p274, %s273, 11
      %s276 = smul.addr %s275, 4
      %s277 = scalar_lea.vmem %s0, %s276
      %s278 = smul.u32 4, %s18
      %s279 = sadd.s32 %s18, 1
      %s280 = smul.u32 4, %s279
      %p281 = scmp.lt.s32.totalorder %s280, 11
      %s282 = scalar_select %p281, %s280, 11
      %s283 = smul.addr %s282, 4
      %s284 = scalar_lea.vmem %s1, %s283
      %s285 = sadd.s32 %s18, 1
      %s286 = smul.u32 4, %s285
      %s287 = smul.u32 4, %s18
      %p288 = scmp.lt.s32.totalorder %s287, 7
      %s289 = scalar_select %p288, %s287, 7
      %s290 = scalar_lea.vmem %s3, %s289
      %s291 = smul.u32 4, %s18
      %s292 = smul.u32 4, %s18
      %p293 = scmp.lt.s32.totalorder %s292, 7
      %s294 = scalar_select %p293, %s292, 7
      %s295 = smul.addr %s294, 8
      %s296 = scalar_lea.vmem %s4, %s295
      %s297 = smul.u32 4, %s18
      %v299 = vld [vmem:[%s277] sm:$0xff]
      %v300 = vld [vmem:[%s277 + $0x8] sm:$0xff]
      %v301 = vld [vmem:[%s284] sm:$0xff]
      %v304 = vunpack.c.l.b16 %v299
      %v305 = vunpack.c.h.b16 %v299
      %v306 = vunpack.c.l.b16 %v300
      %v307 = vunpack.c.h.b16 %v300
      %v308 = vpack.c.b16 %v304, %v304
      %v309 = vpack.c.b16 %v305, %v305
      %v310 = vpack.c.b16 %v306, %v306
      %v311 = vpack.c.b16 %v307, %v307
      %v313 = vunpack.c.l.b16 %v301
      %v314 = vpack.c.b16 %v313, %v313
      %v315 = vld [vmem:[%s2] sm:$0xff]
      %v316 = vpack.c.bf16 %v315, %v315
      %s317 = scalar_lea.vmem %s2, 8
      %v318 = vld [vmem:[%s317] sm:$0xff]
      %v319 = vpack.c.bf16 %v318, %v318
      %320 = vrot.lane.b32.xlu0 %v308, 127
      %v321 = vpop.permute.xlu0 %320
      %322 = vrot.lane.b32.xlu0 %v309, 127
      %v323 = vpop.permute.xlu0 %322
      %324 = vrot.lane.b32.xlu0 %v310, 127
      %v325 = vpop.permute.xlu0 %324
      %326 = vrot.lane.b32.xlu0 %v311, 127
      %v327 = vpop.permute.xlu0 %326
      %328 = vrot.lane.b32.xlu0 %v314, 127
      %v329 = vpop.permute.xlu0 %328
      %vm330 = vcmask 1039360
      %v331 = vsel %vm330, %v321, %v323
      %v332 = vsel %vm330, %v323, %v325
      %v333 = vsel %vm330, %v325, %v327
      %v334 = vsel %vm330, %v327, %v329
      %vm335 = vcmask 64512
      %v337 = vsel %vm335, %v319, 0
      %vm339 = vcmask 1043456
      %v341 = vsel %vm339, %v331, 0
      %v344 = vsel %vm339, %v332, 0
      %v347 = vsel %vm339, %v333, 0
      %v350 = vsel %vm339, %v334, 0
      %352 = vmatpush.bf16.msra.mxu0 0
      %353 = vmatpush.bf16.msra.mxu0 0
      %354 = vmatpush.bf16.msra.mxu0 0
      %355 = vmatpush.bf16.msra.mxu0 0
      %356 = vmatpush.bf16.msra.mxu0 0
      %357 = vmatpush.bf16.msra.mxu0 0
      %358 = vmatpush.bf16.msra.mxu0 0
      %359 = vmatpush.bf16.msra.mxu0 %v341
      %360 = vmatmul.bf16.gmra.mxu0 %v337
      %v361 = vpop.f32.mrf.mxu0
      %v362 = vadd.f32 0.0, %v361
      %v363 = vpop.f32.mrf.mxu0
      %364 = vdwg.mxu0
      %365 = vmatpush.bf16.msra.mxu0 0
      %366 = vmatpush.bf16.msra.mxu0 0
      %367 = vmatpush.bf16.msra.mxu0 0
      %368 = vmatpush.bf16.msra.mxu0 0
      %369 = vmatpush.bf16.msra.mxu0 0
      %370 = vmatpush.bf16.msra.mxu0 0
      %371 = vmatpush.bf16.msra.mxu0 0
      %372 = vmatpush.bf16.msra.mxu0 %v344
      %373 = vmatmul.bf16.gmra.mxu0 %v337
      %v374 = vpop.f32.mrf.mxu0
      %v375 = vadd.f32 0.0, %v374
      %v376 = vpop.f32.mrf.mxu0
      %377 = vdwg.mxu0
      %378 = vmatpush.bf16.msra.mxu0 0
      %379 = vmatpush.bf16.msra.mxu0 0
      %380 = vmatpush.bf16.msra.mxu0 0
      %381 = vmatpush.bf16.msra.mxu0 0
      %382 = vmatpush.bf16.msra.mxu0 0
      %383 = vmatpush.bf16.msra.mxu0 0
      %384 = vmatpush.bf16.msra.mxu0 0
      %385 = vmatpush.bf16.msra.mxu0 %v347
      %386 = vmatmul.bf16.gmra.mxu0 %v337
      %v387 = vpop.f32.mrf.mxu0
      %v388 = vadd.f32 0.0, %v387
      %v389 = vpop.f32.mrf.mxu0
      %390 = vdwg.mxu0
      %391 = vmatpush.bf16.msra.mxu0 0
      %392 = vmatpush.bf16.msra.mxu0 0
      %393 = vmatpush.bf16.msra.mxu0 0
      %394 = vmatpush.bf16.msra.mxu0 0
      %395 = vmatpush.bf16.msra.mxu0 0
      %396 = vmatpush.bf16.msra.mxu0 0
      %397 = vmatpush.bf16.msra.mxu0 0
      %398 = vmatpush.bf16.msra.mxu0 %v350
      %399 = vmatmul.bf16.gmra.mxu0 %v337
      %v400 = vpop.f32.mrf.mxu0
      %v401 = vadd.f32 0.0, %v400
      %v402 = vpop.f32.mrf.mxu0
      %403 = vdwg.mxu0
      %v405 = vsel %vm335, %v316, 0
      %v408 = vsel %vm339, %v308, 0
      %v411 = vsel %vm339, %v309, 0
      %v414 = vsel %vm339, %v310, 0
      %v417 = vsel %vm339, %v311, 0
      %419 = vmatpush.bf16.msra.mxu0 0
      %420 = vmatpush.bf16.msra.mxu0 0
      %421 = vmatpush.bf16.msra.mxu0 0
      %422 = vmatpush.bf16.msra.mxu0 0
      %423 = vmatpush.bf16.msra.mxu0 0
      %424 = vmatpush.bf16.msra.mxu0 0
      %425 = vmatpush.bf16.msra.mxu0 0
      %426 = vmatpush.bf16.msra.mxu0 %v408
      %427 = vmatmul.bf16.gmra.mxu0 %v405
      %v428 = vpop.f32.mrf.mxu0
      %v429 = vadd.f32 %v362, %v428
      %v430 = vpop.f32.mrf.mxu0
      %431 = vdwg.mxu0
      %432 = vmatpush.bf16.msra.mxu0 0
      %433 = vmatpush.bf16.msra.mxu0 0
      %434 = vmatpush.bf16.msra.mxu0 0
      %435 = vmatpush.bf16.msra.mxu0 0
      %436 = vmatpush.bf16.msra.mxu0 0
      %437 = vmatpush.bf16.msra.mxu0 0
      %438 = vmatpush.bf16.msra.mxu0 0
      %439 = vmatpush.bf16.msra.mxu0 %v411
      %440 = vmatmul.bf16.gmra.mxu0 %v405
      %v441 = vpop.f32.mrf.mxu0
      %v442 = vadd.f32 %v375, %v441
      %v443 = vpop.f32.mrf.mxu0
      %444 = vdwg.mxu0
      %445 = vmatpush.bf16.msra.mxu0 0
      %446 = vmatpush.bf16.msra.mxu0 0
      %447 = vmatpush.bf16.msra.mxu0 0
      %448 = vmatpush.bf16.msra.mxu0 0
      %449 = vmatpush.bf16.msra.mxu0 0
      %450 = vmatpush.bf16.msra.mxu0 0
      %451 = vmatpush.bf16.msra.mxu0 0
      %452 = vmatpush.bf16.msra.mxu0 %v414
      %453 = vmatmul.bf16.gmra.mxu0 %v405
      %v454 = vpop.f32.mrf.mxu0
      %v455 = vadd.f32 %v388, %v454
      %v456 = vpop.f32.mrf.mxu0
      %457 = vdwg.mxu0
      %458 = vmatpush.bf16.msra.mxu0 0
      %459 = vmatpush.bf16.msra.mxu0 0
      %460 = vmatpush.bf16.msra.mxu0 0
      %461 = vmatpush.bf16.msra.mxu0 0
      %462 = vmatpush.bf16.msra.mxu0 0
      %463 = vmatpush.bf16.msra.mxu0 0
      %464 = vmatpush.bf16.msra.mxu0 0
      %465 = vmatpush.bf16.msra.mxu0 %v417
      %466 = vmatmul.bf16.gmra.mxu0 %v405
      %v467 = vpop.f32.mrf.mxu0
      %v468 = vadd.f32 %v401, %v467
      %v469 = vpop.f32.mrf.mxu0
      %470 = vdwg.mxu0
      %s471 = scalar_lea.vmem %s2, 16
      %v472 = vld [vmem:[%s471] sm:$0xff]
      %v473 = vpack.c.bf16 %v472, %v472
      %474 = vrot.lane.b32.xlu0 %v308, 126
      %v475 = vpop.permute.xlu0 %474
      %476 = vrot.lane.b32.xlu0 %v309, 126
      %v477 = vpop.permute.xlu0 %476
      %478 = vrot.lane.b32.xlu0 %v310, 126
      %v479 = vpop.permute.xlu0 %478
      %480 = vrot.lane.b32.xlu0 %v311, 126
      %v481 = vpop.permute.xlu0 %480
      %482 = vrot.lane.b32.xlu0 %v314, 126
      %v483 = vpop.permute.xlu0 %482
      %vm484 = vcmask 1031168
      %v485 = vsel %vm484, %v475, %v477
      %v486 = vsel %vm484, %v477, %v479
      %v487 = vsel %vm484, %v479, %v481
      %v488 = vsel %vm484, %v481, %v483
      %v490 = vsel %vm335, %v473, 0
      %v493 = vsel %vm339, %v485, 0
      %v496 = vsel %vm339, %v486, 0
      %v499 = vsel %vm339, %v487, 0
      %v502 = vsel %vm339, %v488, 0
      %504 = vmatpush.bf16.msra.mxu0 0
      %505 = vmatpush.bf16.msra.mxu0 0
      %506 = vmatpush.bf16.msra.mxu0 0
      %507 = vmatpush.bf16.msra.mxu0 0
      %508 = vmatpush.bf16.msra.mxu0 0
      %509 = vmatpush.bf16.msra.mxu0 0
      %510 = vmatpush.bf16.msra.mxu0 0
      %511 = vmatpush.bf16.msra.mxu0 %v493
      %512 = vmatmul.bf16.gmra.mxu0 %v490
      %v513 = vpop.f32.mrf.mxu0
      %v514 = vadd.f32 0.0, %v513
      %v515 = vpop.f32.mrf.mxu0
      %516 = vdwg.mxu0
      %517 = vmatpush.bf16.msra.mxu0 0
      %518 = vmatpush.bf16.msra.mxu0 0
      %519 = vmatpush.bf16.msra.mxu0 0
      %520 = vmatpush.bf16.msra.mxu0 0
      %521 = vmatpush.bf16.msra.mxu0 0
      %522 = vmatpush.bf16.msra.mxu0 0
      %523 = vmatpush.bf16.msra.mxu0 0
      %524 = vmatpush.bf16.msra.mxu0 %v496
      %525 = vmatmul.bf16.gmra.mxu0 %v490
      %v526 = vpop.f32.mrf.mxu0
      %v527 = vadd.f32 0.0, %v526
      %v528 = vpop.f32.mrf.mxu0
      %529 = vdwg.mxu0
      %530 = vmatpush.bf16.msra.mxu0 0
      %531 = vmatpush.bf16.msra.mxu0 0
      %532 = vmatpush.bf16.msra.mxu0 0
      %533 = vmatpush.bf16.msra.mxu0 0
      %534 = vmatpush.bf16.msra.mxu0 0
      %535 = vmatpush.bf16.msra.mxu0 0
      %536 = vmatpush.bf16.msra.mxu0 0
      %537 = vmatpush.bf16.msra.mxu0 %v499
      %538 = vmatmul.bf16.gmra.mxu0 %v490
      %v539 = vpop.f32.mrf.mxu0
      %v540 = vadd.f32 0.0, %v539
      %v541 = vpop.f32.mrf.mxu0
      %542 = vdwg.mxu0
      %543 = vmatpush.bf16.msra.mxu0 0
      %544 = vmatpush.bf16.msra.mxu0 0
      %545 = vmatpush.bf16.msra.mxu0 0
      %546 = vmatpush.bf16.msra.mxu0 0
      %547 = vmatpush.bf16.msra.mxu0 0
      %548 = vmatpush.bf16.msra.mxu0 0
      %549 = vmatpush.bf16.msra.mxu0 0
      %550 = vmatpush.bf16.msra.mxu0 %v502
      %551 = vmatmul.bf16.gmra.mxu0 %v490
      %v552 = vpop.f32.mrf.mxu0
      %v553 = vadd.f32 0.0, %v552
      %v554 = vpop.f32.mrf.mxu0
      %555 = vdwg.mxu0
      %v556 = vadd.f32 %v429, %v514
      %v557 = vadd.f32 %v442, %v527
      %v558 = vadd.f32 %v455, %v540
      %v559 = vadd.f32 %v468, %v553
      %s560 = scalar_lea.vmem %s2, 24
      %v561 = vld [vmem:[%s560] sm:$0xff]
      %v562 = vpack.c.bf16 %v561, %v561
      %563 = vrot.lane.b32.xlu0 %v308, 110
      %v564 = vpop.permute.xlu0 %563
      %565 = vrot.lane.b32.xlu0 %v309, 110
      %v566 = vpop.permute.xlu0 %565
      %567 = vrot.lane.b32.xlu0 %v310, 110
      %v568 = vpop.permute.xlu0 %567
      %569 = vrot.lane.b32.xlu0 %v311, 110
      %v570 = vpop.permute.xlu0 %569
      %571 = vrot.lane.b32.xlu0 %v314, 110
      %v572 = vpop.permute.xlu0 %571
      %vm573 = vcmask 900096
      %v574 = vsel %vm573, %v564, %v566
      %v575 = vsel %vm573, %v566, %v568
      %v576 = vsel %vm573, %v568, %v570
      %v577 = vsel %vm573, %v570, %v572
      %v579 = vsel %vm335, %v562, 0
      %v582 = vsel %vm339, %v574, 0
      %v585 = vsel %vm339, %v575, 0
      %v588 = vsel %vm339, %v576, 0
      %v591 = vsel %vm339, %v577, 0
      %593 = vmatpush.bf16.msra.mxu0 0
      %594 = vmatpush.bf16.msra.mxu0 0
      %595 = vmatpush.bf16.msra.mxu0 0
      %596 = vmatpush.bf16.msra.mxu0 0
      %597 = vmatpush.bf16.msra.mxu0 0
      %598 = vmatpush.bf16.msra.mxu0 0
      %599 = vmatpush.bf16.msra.mxu0 0
      %600 = vmatpush.bf16.msra.mxu0 %v582
      %601 = vmatmul.bf16.gmra.mxu0 %v579
      %v602 = vpop.f32.mrf.mxu0
      %v603 = vadd.f32 0.0, %v602
      %v604 = vpop.f32.mrf.mxu0
      %605 = vdwg.mxu0
      %606 = vmatpush.bf16.msra.mxu0 0
      %607 = vmatpush.bf16.msra.mxu0 0
      %608 = vmatpush.bf16.msra.mxu0 0
      %609 = vmatpush.bf16.msra.mxu0 0
      %610 = vmatpush.bf16.msra.mxu0 0
      %611 = vmatpush.bf16.msra.mxu0 0
      %612 = vmatpush.bf16.msra.mxu0 0
      %613 = vmatpush.bf16.msra.mxu0 %v585
      %614 = vmatmul.bf16.gmra.mxu0 %v579
      %v615 = vpop.f32.mrf.mxu0
      %v616 = vadd.f32 0.0, %v615
      %v617 = vpop.f32.mrf.mxu0
      %618 = vdwg.mxu0
      %619 = vmatpush.bf16.msra.mxu0 0
      %620 = vmatpush.bf16.msra.mxu0 0
      %621 = vmatpush.bf16.msra.mxu0 0
      %622 = vmatpush.bf16.msra.mxu0 0
      %623 = vmatpush.bf16.msra.mxu0 0
      %624 = vmatpush.bf16.msra.mxu0 0
      %625 = vmatpush.bf16.msra.mxu0 0
      %626 = vmatpush.bf16.msra.mxu0 %v588
      %627 = vmatmul.bf16.gmra.mxu0 %v579
      %v628 = vpop.f32.mrf.mxu0
      %v629 = vadd.f32 0.0, %v628
      %v630 = vpop.f32.mrf.mxu0
      %631 = vdwg.mxu0
      %632 = vmatpush.bf16.msra.mxu0 0
      %633 = vmatpush.bf16.msra.mxu0 0
      %634 = vmatpush.bf16.msra.mxu0 0
      %635 = vmatpush.bf16.msra.mxu0 0
      %636 = vmatpush.bf16.msra.mxu0 0
      %637 = vmatpush.bf16.msra.mxu0 0
      %638 = vmatpush.bf16.msra.mxu0 0
      %639 = vmatpush.bf16.msra.mxu0 %v591
      %640 = vmatmul.bf16.gmra.mxu0 %v579
      %v641 = vpop.f32.mrf.mxu0
      %v642 = vadd.f32 0.0, %v641
      %v643 = vpop.f32.mrf.mxu0
      %644 = vdwg.mxu0
      %v645 = vadd.f32 %v556, %v603
      %v646 = vadd.f32 %v557, %v616
      %v647 = vadd.f32 %v558, %v629
      %v648 = vadd.f32 %v559, %v642
      %s649 = scalar_lea.vmem %s2, 32
      %v650 = vld [vmem:[%s649] sm:$0xff]
      %v651 = vpack.c.bf16 %v650, %v650
      %652 = vrot.lane.b32.xlu0 %v308, 109
      %v653 = vpop.permute.xlu0 %652
      %654 = vrot.lane.b32.xlu0 %v309, 109
      %v655 = vpop.permute.xlu0 %654
      %656 = vrot.lane.b32.xlu0 %v310, 109
      %v657 = vpop.permute.xlu0 %656
      %658 = vrot.lane.b32.xlu0 %v311, 109
      %v659 = vpop.permute.xlu0 %658
      %660 = vrot.lane.b32.xlu0 %v314, 109
      %v661 = vpop.permute.xlu0 %660
      %vm662 = vcmask 891904
      %v663 = vsel %vm662, %v653, %v655
      %v664 = vsel %vm662, %v655, %v657
      %v665 = vsel %vm662, %v657, %v659
      %v666 = vsel %vm662, %v659, %v661
      %v668 = vsel %vm335, %v651, 0
      %v671 = vsel %vm339, %v663, 0
      %v674 = vsel %vm339, %v664, 0
      %v677 = vsel %vm339, %v665, 0
      %v680 = vsel %vm339, %v666, 0
      %682 = vmatpush.bf16.msra.mxu0 0
      %683 = vmatpush.bf16.msra.mxu0 0
      %684 = vmatpush.bf16.msra.mxu0 0
      %685 = vmatpush.bf16.msra.mxu0 0
      %686 = vmatpush.bf16.msra.mxu0 0
      %687 = vmatpush.bf16.msra.mxu0 0
      %688 = vmatpush.bf16.msra.mxu0 0
      %689 = vmatpush.bf16.msra.mxu0 %v671
      %690 = vmatmul.bf16.gmra.mxu0 %v668
      %v691 = vpop.f32.mrf.mxu0
      %v692 = vadd.f32 0.0, %v691
      %v693 = vpop.f32.mrf.mxu0
      %694 = vdwg.mxu0
      %695 = vmatpush.bf16.msra.mxu0 0
      %696 = vmatpush.bf16.msra.mxu0 0
      %697 = vmatpush.bf16.msra.mxu0 0
      %698 = vmatpush.bf16.msra.mxu0 0
      %699 = vmatpush.bf16.msra.mxu0 0
      %700 = vmatpush.bf16.msra.mxu0 0
      %701 = vmatpush.bf16.msra.mxu0 0
      %702 = vmatpush.bf16.msra.mxu0 %v674
      %703 = vmatmul.bf16.gmra.mxu0 %v668
      %v704 = vpop.f32.mrf.mxu0
      %v705 = vadd.f32 0.0, %v704
      %v706 = vpop.f32.mrf.mxu0
      %707 = vdwg.mxu0
      %708 = vmatpush.bf16.msra.mxu0 0
      %709 = vmatpush.bf16.msra.mxu0 0
      %710 = vmatpush.bf16.msra.mxu0 0
      %711 = vmatpush.bf16.msra.mxu0 0
      %712 = vmatpush.bf16.msra.mxu0 0
      %713 = vmatpush.bf16.msra.mxu0 0
      %714 = vmatpush.bf16.msra.mxu0 0
      %715 = vmatpush.bf16.msra.mxu0 %v677
      %716 = vmatmul.bf16.gmra.mxu0 %v668
      %v717 = vpop.f32.mrf.mxu0
      %v718 = vadd.f32 0.0, %v717
      %v719 = vpop.f32.mrf.mxu0
      %720 = vdwg.mxu0
      %721 = vmatpush.bf16.msra.mxu0 0
      %722 = vmatpush.bf16.msra.mxu0 0
      %723 = vmatpush.bf16.msra.mxu0 0
      %724 = vmatpush.bf16.msra.mxu0 0
      %725 = vmatpush.bf16.msra.mxu0 0
      %726 = vmatpush.bf16.msra.mxu0 0
      %727 = vmatpush.bf16.msra.mxu0 0
      %728 = vmatpush.bf16.msra.mxu0 %v680
      %729 = vmatmul.bf16.gmra.mxu0 %v668
      %v730 = vpop.f32.mrf.mxu0
      %v731 = vadd.f32 0.0, %v730
      %v732 = vpop.f32.mrf.mxu0
      %733 = vdwg.mxu0
      %v734 = vadd.f32 %v645, %v692
      %v735 = vadd.f32 %v646, %v705
      %v736 = vadd.f32 %v647, %v718
      %v737 = vadd.f32 %v648, %v731
      %s738 = scalar_lea.vmem %s2, 40
      %v739 = vld [vmem:[%s738] sm:$0xff]
      %v740 = vpack.c.bf16 %v739, %v739
      %741 = vrot.lane.b32.xlu0 %v308, 108
      %v742 = vpop.permute.xlu0 %741
      %743 = vrot.lane.b32.xlu0 %v309, 108
      %v744 = vpop.permute.xlu0 %743
      %745 = vrot.lane.b32.xlu0 %v310, 108
      %v746 = vpop.permute.xlu0 %745
      %747 = vrot.lane.b32.xlu0 %v311, 108
      %v748 = vpop.permute.xlu0 %747
      %749 = vrot.lane.b32.xlu0 %v314, 108
      %v750 = vpop.permute.xlu0 %749
      %vm751 = vcmask 883712
      %v752 = vsel %vm751, %v742, %v744
      %v753 = vsel %vm751, %v744, %v746
      %v754 = vsel %vm751, %v746, %v748
      %v755 = vsel %vm751, %v748, %v750
      %v757 = vsel %vm335, %v740, 0
      %v760 = vsel %vm339, %v752, 0
      %v763 = vsel %vm339, %v753, 0
      %v766 = vsel %vm339, %v754, 0
      %v769 = vsel %vm339, %v755, 0
      %771 = vmatpush.bf16.msra.mxu0 0
      %772 = vmatpush.bf16.msra.mxu0 0
      %773 = vmatpush.bf16.msra.mxu0 0
      %774 = vmatpush.bf16.msra.mxu0 0
      %775 = vmatpush.bf16.msra.mxu0 0
      %776 = vmatpush.bf16.msra.mxu0 0
      %777 = vmatpush.bf16.msra.mxu0 0
      %778 = vmatpush.bf16.msra.mxu0 %v760
      %779 = vmatmul.bf16.gmra.mxu0 %v757
      %v780 = vpop.f32.mrf.mxu0
      %v781 = vadd.f32 0.0, %v780
      %v782 = vpop.f32.mrf.mxu0
      %783 = vdwg.mxu0
      %784 = vmatpush.bf16.msra.mxu0 0
      %785 = vmatpush.bf16.msra.mxu0 0
      %786 = vmatpush.bf16.msra.mxu0 0
      %787 = vmatpush.bf16.msra.mxu0 0
      %788 = vmatpush.bf16.msra.mxu0 0
      %789 = vmatpush.bf16.msra.mxu0 0
      %790 = vmatpush.bf16.msra.mxu0 0
      %791 = vmatpush.bf16.msra.mxu0 %v763
      %792 = vmatmul.bf16.gmra.mxu0 %v757
      %v793 = vpop.f32.mrf.mxu0
      %v794 = vadd.f32 0.0, %v793
      %v795 = vpop.f32.mrf.mxu0
      %796 = vdwg.mxu0
      %797 = vmatpush.bf16.msra.mxu0 0
      %798 = vmatpush.bf16.msra.mxu0 0
      %799 = vmatpush.bf16.msra.mxu0 0
      %800 = vmatpush.bf16.msra.mxu0 0
      %801 = vmatpush.bf16.msra.mxu0 0
      %802 = vmatpush.bf16.msra.mxu0 0
      %803 = vmatpush.bf16.msra.mxu0 0
      %804 = vmatpush.bf16.msra.mxu0 %v766
      %805 = vmatmul.bf16.gmra.mxu0 %v757
      %v806 = vpop.f32.mrf.mxu0
      %v807 = vadd.f32 0.0, %v806
      %v808 = vpop.f32.mrf.mxu0
      %809 = vdwg.mxu0
      %810 = vmatpush.bf16.msra.mxu0 0
      %811 = vmatpush.bf16.msra.mxu0 0
      %812 = vmatpush.bf16.msra.mxu0 0
      %813 = vmatpush.bf16.msra.mxu0 0
      %814 = vmatpush.bf16.msra.mxu0 0
      %815 = vmatpush.bf16.msra.mxu0 0
      %816 = vmatpush.bf16.msra.mxu0 0
      %817 = vmatpush.bf16.msra.mxu0 %v769
      %818 = vmatmul.bf16.gmra.mxu0 %v757
      %v819 = vpop.f32.mrf.mxu0
      %v820 = vadd.f32 0.0, %v819
      %v821 = vpop.f32.mrf.mxu0
      %822 = vdwg.mxu0
      %v823 = vadd.f32 %v734, %v781
      %v824 = vadd.f32 %v735, %v794
      %v825 = vadd.f32 %v736, %v807
      %v826 = vadd.f32 %v737, %v820
      %s827 = scalar_lea.vmem %s2, 48
      %v828 = vld [vmem:[%s827] sm:$0xff]
      %v829 = vpack.c.bf16 %v828, %v828
      %830 = vrot.lane.b32.xlu0 %v308, 92
      %v831 = vpop.permute.xlu0 %830
      %832 = vrot.lane.b32.xlu0 %v309, 92
      %v833 = vpop.permute.xlu0 %832
      %834 = vrot.lane.b32.xlu0 %v310, 92
      %v835 = vpop.permute.xlu0 %834
      %836 = vrot.lane.b32.xlu0 %v311, 92
      %v837 = vpop.permute.xlu0 %836
      %838 = vrot.lane.b32.xlu0 %v314, 92
      %v839 = vpop.permute.xlu0 %838
      %vm840 = vcmask 752640
      %v841 = vsel %vm840, %v831, %v833
      %v842 = vsel %vm840, %v833, %v835
      %v843 = vsel %vm840, %v835, %v837
      %v844 = vsel %vm840, %v837, %v839
      %v846 = vsel %vm335, %v829, 0
      %v849 = vsel %vm339, %v841, 0
      %v852 = vsel %vm339, %v842, 0
      %v855 = vsel %vm339, %v843, 0
      %v858 = vsel %vm339, %v844, 0
      %860 = vmatpush.bf16.msra.mxu0 0
      %861 = vmatpush.bf16.msra.mxu0 0
      %862 = vmatpush.bf16.msra.mxu0 0
      %863 = vmatpush.bf16.msra.mxu0 0
      %864 = vmatpush.bf16.msra.mxu0 0
      %865 = vmatpush.bf16.msra.mxu0 0
      %866 = vmatpush.bf16.msra.mxu0 0
      %867 = vmatpush.bf16.msra.mxu0 %v849
      %868 = vmatmul.bf16.gmra.mxu0 %v846
      %v869 = vpop.f32.mrf.mxu0
      %v870 = vadd.f32 0.0, %v869
      %v871 = vpop.f32.mrf.mxu0
      %872 = vdwg.mxu0
      %873 = vmatpush.bf16.msra.mxu0 0
      %874 = vmatpush.bf16.msra.mxu0 0
      %875 = vmatpush.bf16.msra.mxu0 0
      %876 = vmatpush.bf16.msra.mxu0 0
      %877 = vmatpush.bf16.msra.mxu0 0
      %878 = vmatpush.bf16.msra.mxu0 0
      %879 = vmatpush.bf16.msra.mxu0 0
      %880 = vmatpush.bf16.msra.mxu0 %v852
      %881 = vmatmul.bf16.gmra.mxu0 %v846
      %v882 = vpop.f32.mrf.mxu0
      %v883 = vadd.f32 0.0, %v882
      %v884 = vpop.f32.mrf.mxu0
      %885 = vdwg.mxu0
      %886 = vmatpush.bf16.msra.mxu0 0
      %887 = vmatpush.bf16.msra.mxu0 0
      %888 = vmatpush.bf16.msra.mxu0 0
      %889 = vmatpush.bf16.msra.mxu0 0
      %890 = vmatpush.bf16.msra.mxu0 0
      %891 = vmatpush.bf16.msra.mxu0 0
      %892 = vmatpush.bf16.msra.mxu0 0
      %893 = vmatpush.bf16.msra.mxu0 %v855
      %894 = vmatmul.bf16.gmra.mxu0 %v846
      %v895 = vpop.f32.mrf.mxu0
      %v896 = vadd.f32 0.0, %v895
      %v897 = vpop.f32.mrf.mxu0
      %898 = vdwg.mxu0
      %899 = vmatpush.bf16.msra.mxu0 0
      %900 = vmatpush.bf16.msra.mxu0 0
      %901 = vmatpush.bf16.msra.mxu0 0
      %902 = vmatpush.bf16.msra.mxu0 0
      %903 = vmatpush.bf16.msra.mxu0 0
      %904 = vmatpush.bf16.msra.mxu0 0
      %905 = vmatpush.bf16.msra.mxu0 0
      %906 = vmatpush.bf16.msra.mxu0 %v858
      %907 = vmatmul.bf16.gmra.mxu0 %v846
      %v908 = vpop.f32.mrf.mxu0
      %v909 = vadd.f32 0.0, %v908
      %v910 = vpop.f32.mrf.mxu0
      %911 = vdwg.mxu0
      %v912 = vadd.f32 %v823, %v870
      %v913 = vadd.f32 %v824, %v883
      %v914 = vadd.f32 %v825, %v896
      %v915 = vadd.f32 %v826, %v909
      %s916 = scalar_lea.vmem %s2, 56
      %v917 = vld [vmem:[%s916] sm:$0xff]
      %v918 = vpack.c.bf16 %v917, %v917
      %919 = vrot.lane.b32.xlu0 %v308, 91
      %v920 = vpop.permute.xlu0 %919
      %921 = vrot.lane.b32.xlu0 %v309, 91
      %v922 = vpop.permute.xlu0 %921
      %923 = vrot.lane.b32.xlu0 %v310, 91
      %v924 = vpop.permute.xlu0 %923
      %925 = vrot.lane.b32.xlu0 %v311, 91
      %v926 = vpop.permute.xlu0 %925
      %927 = vrot.lane.b32.xlu0 %v314, 91
      %v928 = vpop.permute.xlu0 %927
      %vm929 = vcmask 744448
      %v930 = vsel %vm929, %v920, %v922
      %v931 = vsel %vm929, %v922, %v924
      %v932 = vsel %vm929, %v924, %v926
      %v933 = vsel %vm929, %v926, %v928
      %v935 = vsel %vm335, %v918, 0
      %v938 = vsel %vm339, %v930, 0
      %v941 = vsel %vm339, %v931, 0
      %v944 = vsel %vm339, %v932, 0
      %v947 = vsel %vm339, %v933, 0
      %949 = vmatpush.bf16.msra.mxu0 0
      %950 = vmatpush.bf16.msra.mxu0 0
      %951 = vmatpush.bf16.msra.mxu0 0
      %952 = vmatpush.bf16.msra.mxu0 0
      %953 = vmatpush.bf16.msra.mxu0 0
      %954 = vmatpush.bf16.msra.mxu0 0
      %955 = vmatpush.bf16.msra.mxu0 0
      %956 = vmatpush.bf16.msra.mxu0 %v938
      %957 = vmatmul.bf16.gmra.mxu0 %v935
      %v958 = vpop.f32.mrf.mxu0
      %v959 = vadd.f32 0.0, %v958
      %v960 = vpop.f32.mrf.mxu0
      %961 = vdwg.mxu0
      %962 = vmatpush.bf16.msra.mxu0 0
      %963 = vmatpush.bf16.msra.mxu0 0
      %964 = vmatpush.bf16.msra.mxu0 0
      %965 = vmatpush.bf16.msra.mxu0 0
      %966 = vmatpush.bf16.msra.mxu0 0
      %967 = vmatpush.bf16.msra.mxu0 0
      %968 = vmatpush.bf16.msra.mxu0 0
      %969 = vmatpush.bf16.msra.mxu0 %v941
      %970 = vmatmul.bf16.gmra.mxu0 %v935
      %v971 = vpop.f32.mrf.mxu0
      %v972 = vadd.f32 0.0, %v971
      %v973 = vpop.f32.mrf.mxu0
      %974 = vdwg.mxu0
      %975 = vmatpush.bf16.msra.mxu0 0
      %976 = vmatpush.bf16.msra.mxu0 0
      %977 = vmatpush.bf16.msra.mxu0 0
      %978 = vmatpush.bf16.msra.mxu0 0
      %979 = vmatpush.bf16.msra.mxu0 0
      %980 = vmatpush.bf16.msra.mxu0 0
      %981 = vmatpush.bf16.msra.mxu0 0
      %982 = vmatpush.bf16.msra.mxu0 %v944
      %983 = vmatmul.bf16.gmra.mxu0 %v935
      %v984 = vpop.f32.mrf.mxu0
      %v985 = vadd.f32 0.0, %v984
      %v986 = vpop.f32.mrf.mxu0
      %987 = vdwg.mxu0
      %988 = vmatpush.bf16.msra.mxu0 0
      %989 = vmatpush.bf16.msra.mxu0 0
      %990 = vmatpush.bf16.msra.mxu0 0
      %991 = vmatpush.bf16.msra.mxu0 0
      %992 = vmatpush.bf16.msra.mxu0 0
      %993 = vmatpush.bf16.msra.mxu0 0
      %994 = vmatpush.bf16.msra.mxu0 0
      %995 = vmatpush.bf16.msra.mxu0 %v947
      %996 = vmatmul.bf16.gmra.mxu0 %v935
      %v997 = vpop.f32.mrf.mxu0
      %v998 = vadd.f32 0.0, %v997
      %v999 = vpop.f32.mrf.mxu0
      %1000 = vdwg.mxu0
      %v1001 = vadd.f32 %v912, %v959
      %v1002 = vadd.f32 %v913, %v972
      %v1003 = vadd.f32 %v914, %v985
      %v1004 = vadd.f32 %v915, %v998
      %s1005 = scalar_lea.vmem %s2, 64
      %v1006 = vld [vmem:[%s1005] sm:$0xff]
      %v1007 = vpack.c.bf16 %v1006, %v1006
      %1008 = vrot.lane.b32.xlu0 %v308, 90
      %v1009 = vpop.permute.xlu0 %1008
      %1010 = vrot.lane.b32.xlu0 %v309, 90
      %v1011 = vpop.permute.xlu0 %1010
      %1012 = vrot.lane.b32.xlu0 %v310, 90
      %v1013 = vpop.permute.xlu0 %1012
      %1014 = vrot.lane.b32.xlu0 %v311, 90
      %v1015 = vpop.permute.xlu0 %1014
      %1016 = vrot.lane.b32.xlu0 %v314, 90
      %v1017 = vpop.permute.xlu0 %1016
      %vm1018 = vcmask 736256
      %v1019 = vsel %vm1018, %v1009, %v1011
      %v1020 = vsel %vm1018, %v1011, %v1013
      %v1021 = vsel %vm1018, %v1013, %v1015
      %v1022 = vsel %vm1018, %v1015, %v1017
      %v1024 = vsel %vm335, %v1007, 0
      %v1027 = vsel %vm339, %v1019, 0
      %v1030 = vsel %vm339, %v1020, 0
      %v1033 = vsel %vm339, %v1021, 0
      %v1036 = vsel %vm339, %v1022, 0
      %1038 = vmatpush.bf16.msra.mxu0 0
      %1039 = vmatpush.bf16.msra.mxu0 0
      %1040 = vmatpush.bf16.msra.mxu0 0
      %1041 = vmatpush.bf16.msra.mxu0 0
      %1042 = vmatpush.bf16.msra.mxu0 0
      %1043 = vmatpush.bf16.msra.mxu0 0
      %1044 = vmatpush.bf16.msra.mxu0 0
      %1045 = vmatpush.bf16.msra.mxu0 %v1027
      %1046 = vmatmul.bf16.gmra.mxu0 %v1024
      %v1047 = vpop.f32.mrf.mxu0
      %v1048 = vadd.f32 0.0, %v1047
      %v1049 = vpop.f32.mrf.mxu0
      %1050 = vdwg.mxu0
      %1051 = vmatpush.bf16.msra.mxu0 0
      %1052 = vmatpush.bf16.msra.mxu0 0
      %1053 = vmatpush.bf16.msra.mxu0 0
      %1054 = vmatpush.bf16.msra.mxu0 0
      %1055 = vmatpush.bf16.msra.mxu0 0
      %1056 = vmatpush.bf16.msra.mxu0 0
      %1057 = vmatpush.bf16.msra.mxu0 0
      %1058 = vmatpush.bf16.msra.mxu0 %v1030
      %1059 = vmatmul.bf16.gmra.mxu0 %v1024
      %v1060 = vpop.f32.mrf.mxu0
      %v1061 = vadd.f32 0.0, %v1060
      %v1062 = vpop.f32.mrf.mxu0
      %1063 = vdwg.mxu0
      %1064 = vmatpush.bf16.msra.mxu0 0
      %1065 = vmatpush.bf16.msra.mxu0 0
      %1066 = vmatpush.bf16.msra.mxu0 0
      %1067 = vmatpush.bf16.msra.mxu0 0
      %1068 = vmatpush.bf16.msra.mxu0 0
      %1069 = vmatpush.bf16.msra.mxu0 0
      %1070 = vmatpush.bf16.msra.mxu0 0
      %1071 = vmatpush.bf16.msra.mxu0 %v1033
      %1072 = vmatmul.bf16.gmra.mxu0 %v1024
      %v1073 = vpop.f32.mrf.mxu0
      %v1074 = vadd.f32 0.0, %v1073
      %v1075 = vpop.f32.mrf.mxu0
      %1076 = vdwg.mxu0
      %1077 = vmatpush.bf16.msra.mxu0 0
      %1078 = vmatpush.bf16.msra.mxu0 0
      %1079 = vmatpush.bf16.msra.mxu0 0
      %1080 = vmatpush.bf16.msra.mxu0 0
      %1081 = vmatpush.bf16.msra.mxu0 0
      %1082 = vmatpush.bf16.msra.mxu0 0
      %1083 = vmatpush.bf16.msra.mxu0 0
      %1084 = vmatpush.bf16.msra.mxu0 %v1036
      %1085 = vmatmul.bf16.gmra.mxu0 %v1024
      %v1086 = vpop.f32.mrf.mxu0
      %v1087 = vadd.f32 0.0, %v1086
      %v1088 = vpop.f32.mrf.mxu0
      %1089 = vdwg.mxu0
      %v1090 = vadd.f32 %v1001, %v1048
      %v1091 = vadd.f32 %v1002, %v1061
      %v1092 = vadd.f32 %v1003, %v1074
      %v1093 = vadd.f32 %v1004, %v1087
      %1094 = vst [vmem:[%s296] sm:$0xff] %v1090
      %1095 = vst [vmem:[%s296 + $0x8] sm:$0xff] %v1091
      %1096 = vst [vmem:[%s296 + $0x10] sm:$0xff] %v1092
      %1097 = vst [vmem:[%s296 + $0x18] sm:$0xff] %v1093
      %p1098 = scmp.eq.s32.totalorder %s18, 0
      // Predicated region
      $region37: #{convolution_forward.2} parent=35 // pred_check
        %p1099 = pneg %p1098
      $region38: #{convolution_forward.2} parent=35 // pred_check_branch
        %1101 = sbr.rel (%p1099) target = $region40
      $region39: #{convolution_forward.2} parent=35 // pred_region
        %vm1102 = vcmask 7168
        %1103 = vst.msk [vmem:[%s5] sm:$0xff] %vm1102, 0.0
        %1104 = vst.msk [vmem:[%s6] sm:$0xff] %vm1102, 0.0
      $region40: #{convolution_forward.2} parent=35 // pred_fallthru
        _
      %v1105 = vld [vmem:[%s290] sm:$0xf]
      %v1107 = vperm.slane %v1105, 0
      %v1108 = vperm.slane %v1105, 1
      %v1109 = vperm.slane %v1105, 2
      %v1110 = vperm.slane %v1105, 3
      %v1115 = vmul.f32 %v1090, %v1107
      %v1116 = vmul.f32 %v1091, %v1108
      %v1117 = vmul.f32 %v1092, %v1109
      %v1118 = vmul.f32 %v1093, %v1110
      %v1119 = vld [vmem:[%s5] sm:$0xff]
      %v1120 = vadd.f32 %v1115, %v1116
      %v1121 = vadd.f32 %v1120, %v1117
      %v1122 = vadd.f32 %v1121, %v1118
      %1123 = vadd.xlane.f32.xlu0 %v1122
      %v1124 = vpop.xlane.xlu0 %1123
      %v1125 = vadd.f32 %v1119, %v1124
      %vm1126 = vcmask 7168
      %1127 = vst.msk [vmem:[%s5] sm:$0xff] %vm1126, %v1125
      %v1128 = vld [vmem:[%s6] sm:$0xff]
      %v1129 = vmul.f32 %v1115, %v1090
      %v1130 = vmul.f32 %v1116, %v1091
      %v1131 = vmul.f32 %v1117, %v1092
      %v1132 = vmul.f32 %v1118, %v1093
      %v1133 = vadd.f32 %v1129, %v1130
      %v1134 = vadd.f32 %v1133, %v1131
      %v1135 = vadd.f32 %v1134, %v1132
      %1136 = vadd.xlane.f32.xlu0 %v1135
      %v1137 = vpop.xlane.xlu0 %1136
      %v1138 = vadd.f32 %v1128, %v1137
      %1139 = vst.msk [vmem:[%s6] sm:$0xff] %vm1126, %v1138
      %s1140 = smul.u32 4, %s18
      %p1141 = scmp.lt.s32.totalorder %s1140, 7
      %s1142 = scalar_select %p1141, %s1140, 7
      %s1143 = smul.addr %s1142, 8
      %s1144 = scalar_lea.vmem %s4, %s1143
      // Predicated region
      $region41: #{convolution_forward.2} parent=35 // pred_check
        %p1145 = pneg %p137
      $region42: #{convolution_forward.2} parent=35 // pred_check_branch
        %1147 = sbr.rel (%p1145) target = $region44
      $region43: #{convolution_forward.2} parent=35 // pred_region
        %s1148 = smul.u32 4, %s18
      $region44: #{convolution_forward.2} parent=35 // pred_fallthru
        _
      // Predicated region
      $region45: #{convolution_forward.2} parent=35 // pred_check
        %p1149 = pneg %p158
      $region46: #{convolution_forward.2} parent=35 // pred_check_branch
        %1151 = sbr.rel (%p1149) target = $region48
      $region47: #{convolution_forward.2} parent=35 // pred_region
        _
      $region48: #{convolution_forward.2} parent=35 // pred_fallthru
        _
      // Predicated region
      $region49: #{convolution_forward.2} parent=35 // pred_check
        %p1152 = pneg %p179
      $region50: #{convolution_forward.2} parent=35 // pred_check_branch
        %1154 = sbr.rel (%p1152) target = $region52
      $region51: #{convolution_forward.2} parent=35 // pred_region
        _
      $region52: #{convolution_forward.2} parent=35 // pred_fallthru
        _
      // Predicated region
      $region53: #{convolution_forward.2} parent=35 // pred_check
        %p1155 = pneg %p158
      $region54: #{convolution_forward.2} parent=35 // pred_check_branch
        %1157 = sbr.rel (%p1155) target = $region56
      $region55: #{convolution_forward.2} parent=35 // pred_region
        _
      $region56: #{convolution_forward.2} parent=35 // pred_fallthru
        _
      // Predicated region
      $region57: #{convolution_forward.2} parent=35 // pred_check
        %p1158 = pneg %p179
      $region58: #{convolution_forward.2} parent=35 // pred_check_branch
        %1160 = sbr.rel (%p1158) target = $region60
      $region59: #{convolution_forward.2} parent=35 // pred_region
        _
      $region60: #{convolution_forward.2} parent=35 // pred_fallthru
        _
    $region36: #{convolution_forward.2} parent=5 // pred_fallthru
      _
    %p1161 = scmp.le.s32.totalorder 2, %s13
    // Predicated region
    $region61: #{convolution_forward.2} parent=5 // pred_check
      %p1162 = pneg %p1161
    $region62: #{convolution_forward.2} parent=5 // pred_check_branch
      %1164 = sbr.rel (%p1162) target = $region64
    $region63: #{convolution_forward.2} parent=5 // pred_region
      %s1165 = ssub.s32 %s13, 2
      // Predicated region
      $region65: #{convolution_forward.2} parent=63 // pred_check
        %p1166 = pneg %p143
      $region66: #{convolution_forward.2} parent=63 // pred_check_branch
        %1168 = sbr.rel (%p1166) target = $region68
      $region67: #{convolution_forward.2} parent=63 // pred_region
        %s1169 = smul.u32 4, %s19
        %p1170 = scmp.lt.s32.totalorder %s1169, 7
        %s1171 = scalar_select %p1170, %s1169, 7
        %s1172 = smul.addr %s1171, 8
        %s1173 = scalar_lea.vmem %s4, %s1172
      $region68: #{convolution_forward.2} parent=63 // pred_fallthru
        _
    $region64: #{convolution_forward.2} parent=5 // pred_fallthru
      _
  $region6: #{convolution_forward.2} parent=0 // loop_footer
    %s17 = sadd.s32 1, %s13
  $region7: #{convolution_forward.2} parent=0 // loop_footer_branch
    %12 = sbr.rel target = $region3
  $region8: #{convolution_forward.2} parent=0 // loop_exit
    _

</llo_original>
